<compile_context>
chip_gen: v6e
topology: v6e:2x2x1
jax: 0.10.0
libtpu: 0.0.40
codegen_flags: <defaults>
</compile_context>

<pallas_src>
import jax
import jax.numpy as jnp
from jax.experimental import pallas as pl
from jax.experimental.pallas import tpu as pltpu


def _precond_model_kernel(p_ref, xp_ref, w1_ref, wt_ref, b1_ref,
                          wo_ref, b2_ref, out_ref):
    # p_ref:   (TB, 1)    f32 per-sample noise level p
    # xp_ref:  (TB, 2F)   bf16 [x | prior] flattened & concatenated
    # w1_ref:  (2F, H)    bf16 fused [wx ; wp] projection
    # wt_ref:  (1, H)     f32 c_noise conditioning weights
    # b1_ref:  (1, H)     f32 hidden bias
    # wo_ref:  (H, D2)    bf16 output projection (D2 == d*d)
    # b2_ref:  (1, D2)    f32 output bias
    # out_ref: (TB, D2)   f32 D_x flattened (reshaped to (d, d) in the wrapper)

    # c_noise = log(2 * p) / 2 + 1  -- computed in-kernel (EUP log), f32.
    c_noise = 0.5 * jnp.log(2.0 * p_ref[...]) + 1.0                   # (TB, 1)

    # Fused input projection: single K=2F bf16 matmul, f32 MXU accumulation.
    h = jnp.dot(xp_ref[...], w1_ref[...],
                preferred_element_type=jnp.float32)                   # (TB, H)
    h = h + c_noise * wt_ref[...] + b1_ref[...]
    h = h * jax.nn.sigmoid(h)                                         # silu, f32

    out = jnp.dot(h.astype(jnp.bfloat16), wo_ref[...],
                  preferred_element_type=jnp.float32)                 # (TB, D2)
    out_ref[...] = (out + b2_ref[...]).astype(out_ref.dtype)          # D_x (f32)


def _pick_batch_tile(batch, target=256):
    """Batch row-tile: big enough to fill the MXU M dimension (target 256,
    also fine on v5e's 128-wide MXU), a multiple of 8 (f32 sublanes), and
    keeping >= 2 grid steps when possible so v7x's 2 TensorCores share work."""
    b8 = -(-batch // 8) * 8
    tb = min(target, b8)
    if b8 <= tb and b8 >= 16:                 # would be a 1-step grid: split
        tb = max(8, ((b8 // 2) + 7) // 8 * 8)
    return tb


def _build_precond_call(tb, bp, f2, h, d2, *, single_buffer_weights):
    # Grid-invariant weights are never re-DMA'd; requesting a single VMEM
    # buffer avoids doubling their residency (matters for production F/H on
    # v7x's 64 MiB VMEM; negligible here).
    wmode = ({"pipeline_mode": pl.Buffered(1)}
             if single_buffer_weights else {})
    return pl.pallas_call(
        _precond_model_kernel,
        out_shape=jax.ShapeDtypeStruct((bp, d2), jnp.float32),
        grid=(bp // tb,),
        in_specs=[
            pl.BlockSpec((tb, 1), lambda i: (i, 0)),             # p
            pl.BlockSpec((tb, f2), lambda i: (i, 0)),            # [x | prior]
            pl.BlockSpec((f2, h), lambda i: (0, 0), **wmode),    # w1 = [wx; wp]
            pl.BlockSpec((1, h), lambda i: (0, 0), **wmode),     # wt
            pl.BlockSpec((1, h), lambda i: (0, 0), **wmode),     # b1
            pl.BlockSpec((h, d2), lambda i: (0, 0), **wmode),    # wo
            pl.BlockSpec((1, d2), lambda i: (0, 0), **wmode),    # b2
        ],
        out_specs=pl.BlockSpec((tb, d2), lambda i: (i, 0)),
        compiler_params=pltpu.CompilerParams(
            dimension_semantics=("parallel",),
            vmem_limit_bytes=32 * 1024 * 1024),
    )


def conditional_entropy_precond(x, prior, p, params, *, n, d,
                                use_fp16=False, tb=None):
    """Forward pass of ConditionalEntropyPrecond (fused with the inner model).

    x:     (B, ...)  any trailing shape, flattened to (B, F)
    prior: (B, ...)  same batch, flattened to (B, F)
    p:     (B,)      noise levels (must be > 0, matching the PyTorch module)
    Returns D_x: (B, d, d) float32.
    """
    del n, use_fp16  # p_data unused in forward; dtype resolves to f32 on TPU.
    B = x.shape[0]
    x_flat = x.astype(jnp.float32).reshape(B, -1)
    prior_flat = prior.astype(jnp.float32).reshape(B, -1)
    p32 = p.astype(jnp.float32).reshape(B, 1)

    F = x_flat.shape[1]
    H = params["wx"].shape[1]
    D2 = params["wo"].shape[1]
    assert prior_flat.shape[1] == F
    assert D2 == d * d, (D2, d)

    # Fuse the two F->H projections into one K=2F matmul; bf16 MXU inputs
    # (halves input/weight DMA + VMEM bytes; accumulation stays f32).
    xp = jnp.concatenate([x_flat, prior_flat], axis=1).astype(jnp.bfloat16)
    w1 = jnp.concatenate([params["wx"], params["wp"]],
                         axis=0).astype(jnp.bfloat16)
    wo = params["wo"].astype(jnp.bfloat16)
    wt = params["wt"].astype(jnp.float32)
    b1 = params["b1"].astype(jnp.float32)
    b2 = params["b2"].astype(jnp.float32)

    if tb is None:
        tb = _pick_batch_tile(B)
    # Pad batch to a multiple of the row tile (pad p with 1.0 -> finite log).
    bp = pl.cdiv(B, tb) * tb
    if bp != B:
        pad = bp - B
        xp = jnp.pad(xp, ((0, pad), (0, 0)))
        p32 = jnp.pad(p32, ((0, pad), (0, 0)), constant_values=1.0)

    args = (p32, xp, w1, wt, b1, wo, b2)
    try:
        out = _build_precond_call(tb, bp, 2 * F, H, D2,
                                  single_buffer_weights=True)(*args)
    except Exception:
        # pipeline_mode=pl.Buffered(1) unsupported on this jax build; fall back
        # to default double-buffering of the grid-invariant weights (correct,
        # just slightly more VMEM).
        out = _build_precond_call(tb, bp, 2 * F, H, D2,
                                  single_buffer_weights=False)(*args)

    # D_x = F_x.float().reshape(-1, d, d)  (reshape outside the kernel keeps
    # the in-kernel stores lane-dense on the d*d axis).
    return out[:B].reshape(B, d, d)


def _reference(x, prior, p, params, d):
    """Pure-JAX reference with the same precision policy as the kernel
    (bf16 MXU inputs, f32 accumulation and f32 pointwise math)."""
    B = x.shape[0]
    xf = x.astype(jnp.float32).reshape(B, -1)
    pf = prior.astype(jnp.float32).reshape(B, -1)
    c_noise = jnp.log(2.0 * p.astype(jnp.float32)) / 2.0 + 1.0
    xp = jnp.concatenate([xf, pf], axis=1).astype(jnp.bfloat16)
    w1 = jnp.concatenate([params["wx"], params["wp"]],
                         axis=0).astype(jnp.bfloat16)
    h = jnp.dot(xp, w1, preferred_element_type=jnp.float32)
    h = h + c_noise[:, None] * params["wt"] + params["b1"]
    h = h * jax.nn.sigmoid(h)
    f_x = jnp.dot(h.astype(jnp.bfloat16), params["wo"].astype(jnp.bfloat16),
                  preferred_element_type=jnp.float32) + params["b2"]
    return f_x.astype(jnp.float32).reshape(B, d, d)


if __name__ == "__main__":
    # Small shapes consistent with the module: D_x is (B, d, d) with d = 16,
    # x / prior are (B, d, d) flattened to F = 256, hidden H = 128.  All lane
    # dims are multiples of 128 (ideal MXU / vst layout).
    n, d = 8, 16
    B = 16
    F = d * d
    H = 128
    D2 = d * d

    key = jax.random.PRNGKey(0)
    keys = jax.random.split(key, 7)
    x = jax.random.normal(keys[0], (B, d, d), dtype=jnp.float32)
    prior = jax.random.normal(keys[1], (B, d, d), dtype=jnp.float32)
    p = jax.random.uniform(keys[2], (B,), dtype=jnp.float32,
                           minval=0.05, maxval=0.5)

    params = dict(
        wx=jax.random.normal(keys[3], (F, H), dtype=jnp.float32) / jnp.sqrt(F),
        wp=jax.random.normal(keys[4], (F, H), dtype=jnp.float32) / jnp.sqrt(F),
        wt=jax.random.normal(keys[5], (1, H), dtype=jnp.float32),
        b1=jnp.zeros((1, H), dtype=jnp.float32),
        wo=jax.random.normal(keys[6], (H, D2), dtype=jnp.float32) / jnp.sqrt(H),
        b2=jnp.zeros((1, D2), dtype=jnp.float32),
    )

    out = conditional_entropy_precond(x, prior, p, params, n=n, d=d)
    out = jax.block_until_ready(out)

    ref = _reference(x, prior, p, params, d)
    assert out.shape == (B, d, d), out.shape
    # Tolerance covers MXU-vs-XLA rounding under the shared bf16-input /
    # f32-accumulate precision policy.
    assert jnp.allclose(out, ref, atol=2e-2, rtol=2e-2), \
        float(jnp.max(jnp.abs(out - ref)))

    print("KERNEL_OK")
</pallas_src>

<mosaic_0001>
module attributes {stable_mosaic.version = 11 : i64} {
  func.func @_precond_model_kernel(%arg0: i32, %arg1: memref<8x1xf32, #tpu.memory_space<vmem>>, %arg2: memref<8x512xbf16, #tpu.memory_space<vmem>>, %arg3: memref<512x128xbf16, #tpu.memory_space<vmem>>, %arg4: memref<1x128xf32, #tpu.memory_space<vmem>>, %arg5: memref<1x128xf32, #tpu.memory_space<vmem>>, %arg6: memref<128x256xbf16, #tpu.memory_space<vmem>>, %arg7: memref<1x256xf32, #tpu.memory_space<vmem>>, %arg8: memref<8x256xf32, #tpu.memory_space<vmem>>) attributes {dimension_semantics = [#tpu.dimension_semantics<parallel>], iteration_bounds = array<i64: 2>, scalar_prefetch = 0 : i64, scratch_operands = 0 : i64, tpu.core_type = #tpu.core_type<tc>, window_params = [{transform_indices = @transform_0, window_bounds = array<i64: 8, 1>}, {transform_indices = @transform_1, window_bounds = array<i64: 8, 512>}, {pipeline_mode = #tpu.pipeline_mode<synchronous>, transform_indices = @transform_2, window_bounds = array<i64: 512, 128>}, {pipeline_mode = #tpu.pipeline_mode<synchronous>, transform_indices = @transform_3, window_bounds = array<i64: 1, 128>}, {pipeline_mode = #tpu.pipeline_mode<synchronous>, transform_indices = @transform_4, window_bounds = array<i64: 1, 128>}, {pipeline_mode = #tpu.pipeline_mode<synchronous>, transform_indices = @transform_5, window_bounds = array<i64: 128, 256>}, {pipeline_mode = #tpu.pipeline_mode<synchronous>, transform_indices = @transform_6, window_bounds = array<i64: 1, 256>}, {transform_indices = @transform_7, window_bounds = array<i64: 8, 256>}]} {
    %c0 = arith.constant 0 : index
    %c0_0 = arith.constant 0 : index
    %0 = vector.load %arg1[%c0, %c0_0] : memref<8x1xf32, #tpu.memory_space<vmem>>, vector<8x1xf32>
    %cst = arith.constant 2.000000e+00 : f32
    %1 = vector.broadcast %cst : f32 to vector<8x1xf32>
    %2 = arith.mulf %1, %0 : vector<8x1xf32>
    %3 = math.log %2 : vector<8x1xf32>
    %cst_1 = arith.constant 5.000000e-01 : f32
    %4 = vector.broadcast %cst_1 : f32 to vector<8x1xf32>
    %5 = arith.mulf %4, %3 : vector<8x1xf32>
    %cst_2 = arith.constant 1.000000e+00 : f32
    %6 = vector.broadcast %cst_2 : f32 to vector<8x1xf32>
    %7 = arith.addf %5, %6 : vector<8x1xf32>
    %c0_3 = arith.constant 0 : index
    %c0_4 = arith.constant 0 : index
    %8 = vector.load %arg2[%c0_3, %c0_4] : memref<8x512xbf16, #tpu.memory_space<vmem>>, vector<8x512xbf16>
    %c0_5 = arith.constant 0 : index
    %c0_6 = arith.constant 0 : index
    %9 = vector.load %arg3[%c0_5, %c0_6] : memref<512x128xbf16, #tpu.memory_space<vmem>>, vector<512x128xbf16>
    %cst_7 = arith.constant dense<0.000000e+00> : vector<8x128xf32>
    %10 = tpu.matmul %8, %9, %cst_7 {dimension_numbers = #tpu.dot_dimension_numbers<[1], [0], [0], [1], [0, 0, 1, 1], [], []>} : vector<8x512xbf16>, vector<512x128xbf16>, vector<8x128xf32> -> vector<8x128xf32>
    %c0_8 = arith.constant 0 : index
    %c0_9 = arith.constant 0 : index
    %11 = vector.load %arg4[%c0_8, %c0_9] : memref<1x128xf32, #tpu.memory_space<vmem>>, vector<1x128xf32>
    %12 = vector.broadcast %7 : vector<8x1xf32> to vector<8x128xf32>
    %13 = vector.broadcast %11 : vector<1x128xf32> to vector<8x128xf32>
    %14 = arith.mulf %12, %13 : vector<8x128xf32>
    %15 = arith.addf %10, %14 : vector<8x128xf32>
    %c0_10 = arith.constant 0 : index
    %c0_11 = arith.constant 0 : index
    %16 = vector.load %arg5[%c0_10, %c0_11] : memref<1x128xf32, #tpu.memory_space<vmem>>, vector<1x128xf32>
    %17 = vector.broadcast %16 : vector<1x128xf32> to vector<8x128xf32>
    %18 = arith.addf %15, %17 : vector<8x128xf32>
    %19 = arith.negf %18 : vector<8x128xf32>
    %20 = math.exp %19 : vector<8x128xf32>
    %cst_12 = arith.constant 1.000000e+00 : f32
    %21 = vector.broadcast %cst_12 : f32 to vector<8x128xf32>
    %22 = arith.addf %21, %20 : vector<8x128xf32>
    %23 = arith.divf %21, %22 : vector<8x128xf32>
    %24 = arith.mulf %18, %23 : vector<8x128xf32>
    %25 = arith.truncf %24 : vector<8x128xf32> to vector<8x128xbf16>
    %c0_13 = arith.constant 0 : index
    %c0_14 = arith.constant 0 : index
    %26 = vector.load %arg6[%c0_13, %c0_14] : memref<128x256xbf16, #tpu.memory_space<vmem>>, vector<128x256xbf16>
    %cst_15 = arith.constant dense<0.000000e+00> : vector<8x256xf32>
    %27 = tpu.matmul %25, %26, %cst_15 {dimension_numbers = #tpu.dot_dimension_numbers<[1], [0], [0], [1], [0, 0, 1, 1], [], []>} : vector<8x128xbf16>, vector<128x256xbf16>, vector<8x256xf32> -> vector<8x256xf32>
    %c0_16 = arith.constant 0 : index
    %c0_17 = arith.constant 0 : index
    %28 = vector.load %arg7[%c0_16, %c0_17] : memref<1x256xf32, #tpu.memory_space<vmem>>, vector<1x256xf32>
    %29 = vector.broadcast %28 : vector<1x256xf32> to vector<8x256xf32>
    %30 = arith.addf %27, %29 : vector<8x256xf32>
    %c0_18 = arith.constant 0 : index
    %c0_19 = arith.constant 0 : index
    %31 = vector.load %arg8[%c0_18, %c0_19] : memref<8x256xf32, #tpu.memory_space<vmem>>, vector<8x256xf32>
    tpu.vector_store %arg8[%c0_18, %c0_19], %30 {strides = array<i32>} : memref<8x256xf32, #tpu.memory_space<vmem>>, vector<8x256xf32>,
    return
  }
  func.func @transform_0(%arg0: i32) -> (i32, i32) {
    %c0_i32 = arith.constant 0 : i32
    %c0_i32_0 = arith.constant 0 : i32
    return %arg0, %c0_i32 : i32, i32
  }
  func.func @transform_1(%arg0: i32) -> (i32, i32) {
    %c0_i32 = arith.constant 0 : i32
    %c0_i32_0 = arith.constant 0 : i32
    return %arg0, %c0_i32 : i32, i32
  }
  func.func @transform_2(%arg0: i32) -> (i32, i32) {
    %c0_i32 = arith.constant 0 : i32
    %c0_i32_0 = arith.constant 0 : i32
    %c0_i32_1 = arith.constant 0 : i32
    return %c0_i32, %c0_i32_0 : i32, i32
  }
  func.func @transform_3(%arg0: i32) -> (i32, i32) {
    %c0_i32 = arith.constant 0 : i32
    %c0_i32_0 = arith.constant 0 : i32
    %c0_i32_1 = arith.constant 0 : i32
    return %c0_i32, %c0_i32_0 : i32, i32
  }
  func.func @transform_4(%arg0: i32) -> (i32, i32) {
    %c0_i32 = arith.constant 0 : i32
    %c0_i32_0 = arith.constant 0 : i32
    %c0_i32_1 = arith.constant 0 : i32
    return %c0_i32, %c0_i32_0 : i32, i32
  }
  func.func @transform_5(%arg0: i32) -> (i32, i32) {
    %c0_i32 = arith.constant 0 : i32
    %c0_i32_0 = arith.constant 0 : i32
    %c0_i32_1 = arith.constant 0 : i32
    return %c0_i32, %c0_i32_0 : i32, i32
  }
  func.func @transform_6(%arg0: i32) -> (i32, i32) {
    %c0_i32 = arith.constant 0 : i32
    %c0_i32_0 = arith.constant 0 : i32
    %c0_i32_1 = arith.constant 0 : i32
    return %c0_i32, %c0_i32_0 : i32, i32
  }
  func.func @transform_7(%arg0: i32) -> (i32, i32) {
    %c0_i32 = arith.constant 0 : i32
    %c0_i32_0 = arith.constant 0 : i32
    return %arg0, %c0_i32 : i32, i32
  }
}

module attributes {stable_mosaic.version = 11 : i64} {
  func.func @_precond_model_kernel(%arg0: i32, %arg1: memref<8x1xf32, #tpu.memory_space<vmem>>, %arg2: memref<8x512xbf16, #tpu.memory_space<vmem>>, %arg3: memref<512x128xbf16, #tpu.memory_space<vmem>>, %arg4: memref<1x128xf32, #tpu.memory_space<vmem>>, %arg5: memref<1x128xf32, #tpu.memory_space<vmem>>, %arg6: memref<128x256xbf16, #tpu.memory_space<vmem>>, %arg7: memref<1x256xf32, #tpu.memory_space<vmem>>, %arg8: memref<8x256xf32, #tpu.memory_space<vmem>>) attributes {dimension_semantics = [#tpu.dimension_semantics<parallel>], iteration_bounds = array<i64: 2>, scalar_prefetch = 0 : i64, scratch_operands = 0 : i64, tpu.core_type = #tpu.core_type<tc>, window_params = [{transform_indices = @transform_0, window_bounds = array<i64: 8, 1>}, {transform_indices = @transform_1, window_bounds = array<i64: 8, 512>}, {pipeline_mode = #tpu.pipeline_mode<synchronous>, transform_indices = @transform_2, window_bounds = array<i64: 512, 128>}, {pipeline_mode = #tpu.pipeline_mode<synchronous>, transform_indices = @transform_3, window_bounds = array<i64: 1, 128>}, {pipeline_mode = #tpu.pipeline_mode<synchronous>, transform_indices = @transform_4, window_bounds = array<i64: 1, 128>}, {pipeline_mode = #tpu.pipeline_mode<synchronous>, transform_indices = @transform_5, window_bounds = array<i64: 128, 256>}, {pipeline_mode = #tpu.pipeline_mode<synchronous>, transform_indices = @transform_6, window_bounds = array<i64: 1, 256>}, {transform_indices = @transform_7, window_bounds = array<i64: 8, 256>}]} {
    %c0 = arith.constant 0 : index
    %c0_0 = arith.constant 0 : index
    %0 = vector.load %arg1[%c0, %c0_0] : memref<8x1xf32, #tpu.memory_space<vmem>>, vector<8x1xf32>
    %cst = arith.constant 2.000000e+00 : f32
    %1 = vector.broadcast %cst : f32 to vector<8x1xf32>
    %2 = arith.mulf %1, %0 : vector<8x1xf32>
    %3 = math.log %2 : vector<8x1xf32>
    %cst_1 = arith.constant 5.000000e-01 : f32
    %4 = vector.broadcast %cst_1 : f32 to vector<8x1xf32>
    %5 = arith.mulf %4, %3 : vector<8x1xf32>
    %cst_2 = arith.constant 1.000000e+00 : f32
    %6 = vector.broadcast %cst_2 : f32 to vector<8x1xf32>
    %7 = arith.addf %5, %6 : vector<8x1xf32>
    %c0_3 = arith.constant 0 : index
    %c0_4 = arith.constant 0 : index
    %8 = vector.load %arg2[%c0_3, %c0_4] : memref<8x512xbf16, #tpu.memory_space<vmem>>, vector<8x512xbf16>
    %c0_5 = arith.constant 0 : index
    %c0_6 = arith.constant 0 : index
    %9 = vector.load %arg3[%c0_5, %c0_6] : memref<512x128xbf16, #tpu.memory_space<vmem>>, vector<512x128xbf16>
    %cst_7 = arith.constant dense<0.000000e+00> : vector<8x128xf32>
    %10 = tpu.matmul %8, %9, %cst_7 {dimension_numbers = #tpu.dot_dimension_numbers<[1], [0], [0], [1], [0, 0, 1, 1], [], []>} : vector<8x512xbf16>, vector<512x128xbf16>, vector<8x128xf32> -> vector<8x128xf32>
    %c0_8 = arith.constant 0 : index
    %c0_9 = arith.constant 0 : index
    %11 = vector.load %arg4[%c0_8, %c0_9] : memref<1x128xf32, #tpu.memory_space<vmem>>, vector<1x128xf32>
    %12 = vector.broadcast %7 : vector<8x1xf32> to vector<8x128xf32>
    %13 = vector.broadcast %11 : vector<1x128xf32> to vector<8x128xf32>
    %14 = arith.mulf %12, %13 : vector<8x128xf32>
    %15 = arith.addf %10, %14 : vector<8x128xf32>
    %c0_10 = arith.constant 0 : index
    %c0_11 = arith.constant 0 : index
    %16 = vector.load %arg5[%c0_10, %c0_11] : memref<1x128xf32, #tpu.memory_space<vmem>>, vector<1x128xf32>
    %17 = vector.broadcast %16 : vector<1x128xf32> to vector<8x128xf32>
    %18 = arith.addf %15, %17 : vector<8x128xf32>
    %19 = arith.negf %18 : vector<8x128xf32>
    %20 = math.exp %19 : vector<8x128xf32>
    %cst_12 = arith.constant 1.000000e+00 : f32
    %21 = vector.broadcast %cst_12 : f32 to vector<8x128xf32>
    %22 = arith.addf %21, %20 : vector<8x128xf32>
    %23 = arith.divf %21, %22 : vector<8x128xf32>
    %24 = arith.mulf %18, %23 : vector<8x128xf32>
    %25 = arith.truncf %24 : vector<8x128xf32> to vector<8x128xbf16>
    %c0_13 = arith.constant 0 : index
    %c0_14 = arith.constant 0 : index
    %26 = vector.load %arg6[%c0_13, %c0_14] : memref<128x256xbf16, #tpu.memory_space<vmem>>, vector<128x256xbf16>
    %cst_15 = arith.constant dense<0.000000e+00> : vector<8x256xf32>
    %27 = tpu.matmul %25, %26, %cst_15 {dimension_numbers = #tpu.dot_dimension_numbers<[1], [0], [0], [1], [0, 0, 1, 1], [], []>} : vector<8x128xbf16>, vector<128x256xbf16>, vector<8x256xf32> -> vector<8x256xf32>
    %c0_16 = arith.constant 0 : index
    %c0_17 = arith.constant 0 : index
    %28 = vector.load %arg7[%c0_16, %c0_17] : memref<1x256xf32, #tpu.memory_space<vmem>>, vector<1x256xf32>
    %29 = vector.broadcast %28 : vector<1x256xf32> to vector<8x256xf32>
    %30 = arith.addf %27, %29 : vector<8x256xf32>
    %c0_18 = arith.constant 0 : index
    %c0_19 = arith.constant 0 : index
    %31 = vector.load %arg8[%c0_18, %c0_19] : memref<8x256xf32, #tpu.memory_space<vmem>>, vector<8x256xf32>
    tpu.vector_store %arg8[%c0_18, %c0_19], %30 {strides = array<i32>} : memref<8x256xf32, #tpu.memory_space<vmem>>, vector<8x256xf32>,
    return
  }
  func.func @transform_0(%arg0: i32) -> (i32, i32) {
    %c0_i32 = arith.constant 0 : i32
    %c0_i32_0 = arith.constant 0 : i32
    return %arg0, %c0_i32 : i32, i32
  }
  func.func @transform_1(%arg0: i32) -> (i32, i32) {
    %c0_i32 = arith.constant 0 : i32
    %c0_i32_0 = arith.constant 0 : i32
    return %arg0, %c0_i32 : i32, i32
  }
  func.func @transform_2(%arg0: i32) -> (i32, i32) {
    %c0_i32 = arith.constant 0 : i32
    %c0_i32_0 = arith.constant 0 : i32
    %c0_i32_1 = arith.constant 0 : i32
    return %c0_i32, %c0_i32_0 : i32, i32
  }
  func.func @transform_3(%arg0: i32) -> (i32, i32) {
    %c0_i32 = arith.constant 0 : i32
    %c0_i32_0 = arith.constant 0 : i32
    %c0_i32_1 = arith.constant 0 : i32
    return %c0_i32, %c0_i32_0 : i32, i32
  }
  func.func @transform_4(%arg0: i32) -> (i32, i32) {
    %c0_i32 = arith.constant 0 : i32
    %c0_i32_0 = arith.constant 0 : i32
    %c0_i32_1 = arith.constant 0 : i32
    return %c0_i32, %c0_i32_0 : i32, i32
  }
  func.func @transform_5(%arg0: i32) -> (i32, i32) {
    %c0_i32 = arith.constant 0 : i32
    %c0_i32_0 = arith.constant 0 : i32
    %c0_i32_1 = arith.constant 0 : i32
    return %c0_i32, %c0_i32_0 : i32, i32
  }
  func.func @transform_6(%arg0: i32) -> (i32, i32) {
    %c0_i32 = arith.constant 0 : i32
    %c0_i32_0 = arith.constant 0 : i32
    %c0_i32_1 = arith.constant 0 : i32
    return %c0_i32, %c0_i32_0 : i32, i32
  }
  func.func @transform_7(%arg0: i32) -> (i32, i32) {
    %c0_i32 = arith.constant 0 : i32
    %c0_i32_0 = arith.constant 0 : i32
    return %arg0, %c0_i32 : i32, i32
  }
}

</mosaic_0001>

<llo_original>
// kernel: tpu_custom_call.1
$region0: #{tpu_custom_call.1}
  #allocation0 [shape = 'u32[]', space=smem, size = 0x4, offset = 0x4, fixed_abs, tag = 'smem constant byte address 0x4 - core index']
  #allocation1 [shape = 'u32[144,128]{1,0:T(1,128)}', space=vmem, size = 0x12000, scoped, tag = 'internal scratch']
  %s0 = inlined_call_operand.vmem [shape: f32[16,1], index: 0, kind: input, shape index: {}]
  %s1 = inlined_call_operand.hbm [shape: bf16[16,512], index: 1, kind: input, shape index: {}]
  %s2 = inlined_call_operand.hbm [shape: bf16[512,128], index: 2, kind: input, shape index: {}]
  %s3 = inlined_call_operand.vmem [shape: f32[1,128], index: 3, kind: input, shape index: {}]
  %s4 = inlined_call_operand.vmem [shape: f32[1,128], index: 4, kind: input, shape index: {}]
  %s5 = inlined_call_operand.hbm [shape: bf16[128,256], index: 5, kind: input, shape index: {}]
  %s6 = inlined_call_operand.vmem [shape: f32[1,256], index: 6, kind: input, shape index: {}]
  %s7 = inlined_call_operand.hbm [shape: f32[16,256], index: 7, kind: output, shape index: {}]
  %s8 = sld [smem:[#allocation0]]
  $region73: #{tpu_custom_call.1} parent=0
    _
  %s10 = ssub.s32 1, %s8
  %s11 = scalar_select 0, %s10, %s8
  $region1: #{tpu_custom_call.1} parent=0
    #allocation2 [shape = 'u8[16384]{0}', space=vmem, size = 0x4000, scoped, tag = 'input window, operand 1']
    #allocation3 [shape = 's32[2]{0}', space=sflag, size = 0x8, scoped, tag = 'scoped memory for tpu_custom_call.1']
    #allocation4 [shape = 's32[2]{0}', space=sflag, size = 0x8, scoped, tag = 'scoped memory for tpu_custom_call.1']
    #allocation5 [shape = 'u8[131072]{0}', space=vmem, size = 0x20000, scoped, tag = 'input window, operand 2, single buffered']
    #allocation6 [shape = 's32[1]{0}', space=sflag, size = 0x4, scoped, tag = 'scoped memory for tpu_custom_call.1']
    #allocation7 [shape = 'u8[65536]{0}', space=vmem, size = 0x10000, scoped, tag = 'input window, operand 5, single buffered']
    #allocation8 [shape = 'u8[16384]{0}', space=vmem, size = 0x4000, scoped, tag = 'output window, operand 0']
    %12 = vsyncpa [#allocation3], 0
    %s13 = scalar_lea.sflag [#allocation3], 1
    %14 = vsyncpa %s13, 0
    %15 = vsyncpa [#allocation6], 0
    %16 = vsyncpa [#allocation4], 0
    %s17 = scalar_lea.sflag [#allocation4], 1
    %18 = vsyncpa %s17, 0
    loop: start=0, step=1, limit=4
    $region2: #{tpu_custom_call.1} parent=1 // loop_pre_header
      _
    $region3: #{tpu_custom_call.1} parent=1 // loop_header
      %s20 = sphi 0, %s24
      %p21 = scmp.ge.s32.totalorder %s20, 4
      %s30 = sphi 0, %s32
      %s33 = sphi 0, %s30
      %s34 = sphi 0, %s33
      %s50 = sphi 0, %s34
      %s56 = sphi 0, %s58
      %s59 = sphi 0, %s56
      %s60 = sphi 0, %s59
      %s76 = sphi 0, %s60
      %s80 = sphi 0, %s80
      %s82 = sphi 0, %s80
      %s83 = sphi 0, %s82
      %s97 = sphi 0, %s83
      %s101 = sphi 0, %s101
      %s103 = sphi 0, %s101
      %s104 = sphi 0, %s103
      %s118 = sphi 0, %s104
      %s122 = sphi 0, %s122
      %s124 = sphi 0, %s122
      %s125 = sphi 0, %s124
      %s139 = sphi 0, %s125
      %s143 = sphi 0, %s143
      %s145 = sphi 0, %s143
      %s146 = sphi 0, %s145
      %s160 = sphi 0, %s146
      %s164 = sphi 0, %s164
      %s166 = sphi 0, %s164
      %s167 = sphi 0, %s166
      %s181 = sphi 0, %s167
      %s187 = sphi 0, %s189
      %s190 = sphi 0, %s187
      %s191 = sphi 0, %s190
      %s207 = sphi 0, %s191
    $region4: #{tpu_custom_call.1} parent=1 // loop_header_branch
      %23 = sbr.rel (%p21) target = $region8
    $region5: #{tpu_custom_call.1} parent=1 // loop_body
      %s25 = ssub.s32 %s20, 1
      %s26 = ssub.s32 %s20, 2
      %s27 = sadd.s32 %s20, 1
      %s28 = ssub.s32 %s20, %s27
      %p29 = scmp.eq.s32.totalorder %s28, 0
      %s31 = sadd.s32 %s30, 1
      %s32 = scalar_select %p29, %s30, %s31
      %p35 = pneg %p29
      %p36 = scmp.eq.s32.totalorder %s20, 1
      %p37 = por %p35, %p36
      %p38 = scmp.ne.s32.totalorder %s30, %s33
      %p39 = scmp.eq.s32.totalorder %s20, 0
      %p40 = por %p38, %p39
      %p41 = scmp.ne.s32.totalorder %s30, %s33
      %p42 = scmp.eq.s32.totalorder %s25, 1
      %p43 = por %p41, %p42
      %p44 = scmp.ne.s32.totalorder %s33, %s34
      %p45 = scmp.eq.s32.totalorder %s25, 0
      %p46 = por %p44, %p45
      %p47 = scmp.ne.s32.totalorder %s33, %s34
      %p48 = scmp.eq.s32.totalorder %s26, 1
      %p49 = por %p47, %p48
      %p51 = scmp.ne.s32.totalorder %s34, %s50
      %p52 = scmp.eq.s32.totalorder %s26, 0
      %p53 = por %p51, %p52
      %s54 = ssub.s32 %s20, %s27
      %p55 = scmp.eq.s32.totalorder %s54, 0
      %s57 = sadd.s32 %s56, 1
      %s58 = scalar_select %p55, %s56, %s57
      %p61 = pneg %p55
      %p62 = scmp.eq.s32.totalorder %s20, 1
      %p63 = por %p61, %p62
      %p64 = scmp.ne.s32.totalorder %s56, %s59
      %p65 = scmp.eq.s32.totalorder %s20, 0
      %p66 = por %p64, %p65
      %p67 = scmp.ne.s32.totalorder %s56, %s59
      %p68 = scmp.eq.s32.totalorder %s25, 1
      %p69 = por %p67, %p68
      %p70 = scmp.ne.s32.totalorder %s59, %s60
      %p71 = scmp.eq.s32.totalorder %s25, 0
      %p72 = por %p70, %p71
      %p73 = scmp.ne.s32.totalorder %s59, %s60
      %p74 = scmp.eq.s32.totalorder %s26, 1
      %p75 = por %p73, %p74
      %p77 = scmp.ne.s32.totalorder %s60, %s76
      %p78 = scmp.eq.s32.totalorder %s26, 0
      %p79 = por %p77, %p78
      %s81 = sadd.s32 %s80, 1
      %p84 = scmp.eq.s32.totalorder %s20, 1
      %p85 = scmp.ne.s32.totalorder %s80, %s82
      %p86 = scmp.eq.s32.totalorder %s20, 0
      %p87 = por %p85, %p86
      %p88 = scmp.ne.s32.totalorder %s80, %s82
      %p89 = scmp.eq.s32.totalorder %s25, 1
      %p90 = por %p88, %p89
      %p91 = scmp.ne.s32.totalorder %s82, %s83
      %p92 = scmp.eq.s32.totalorder %s25, 0
      %p93 = por %p91, %p92
      %p94 = scmp.ne.s32.totalorder %s82, %s83
      %p95 = scmp.eq.s32.totalorder %s26, 1
      %p96 = por %p94, %p95
      %p98 = scmp.ne.s32.totalorder %s83, %s97
      %p99 = scmp.eq.s32.totalorder %s26, 0
      %p100 = por %p98, %p99
      %s102 = sadd.s32 %s101, 1
      %p105 = scmp.eq.s32.totalorder %s20, 1
      %p106 = scmp.ne.s32.totalorder %s101, %s103
      %p107 = scmp.eq.s32.totalorder %s20, 0
      %p108 = por %p106, %p107
      %p109 = scmp.ne.s32.totalorder %s101, %s103
      %p110 = scmp.eq.s32.totalorder %s25, 1
      %p111 = por %p109, %p110
      %p112 = scmp.ne.s32.totalorder %s103, %s104
      %p113 = scmp.eq.s32.totalorder %s25, 0
      %p114 = por %p112, %p113
      %p115 = scmp.ne.s32.totalorder %s103, %s104
      %p116 = scmp.eq.s32.totalorder %s26, 1
      %p117 = por %p115, %p116
      %p119 = scmp.ne.s32.totalorder %s104, %s118
      %p120 = scmp.eq.s32.totalorder %s26, 0
      %p121 = por %p119, %p120
      %s123 = sadd.s32 %s122, 1
      %p126 = scmp.eq.s32.totalorder %s20, 1
      %p127 = scmp.ne.s32.totalorder %s122, %s124
      %p128 = scmp.eq.s32.totalorder %s20, 0
      %p129 = por %p127, %p128
      %p130 = scmp.ne.s32.totalorder %s122, %s124
      %p131 = scmp.eq.s32.totalorder %s25, 1
      %p132 = por %p130, %p131
      %p133 = scmp.ne.s32.totalorder %s124, %s125
      %p134 = scmp.eq.s32.totalorder %s25, 0
      %p135 = por %p133, %p134
      %p136 = scmp.ne.s32.totalorder %s124, %s125
      %p137 = scmp.eq.s32.totalorder %s26, 1
      %p138 = por %p136, %p137
      %p140 = scmp.ne.s32.totalorder %s125, %s139
      %p141 = scmp.eq.s32.totalorder %s26, 0
      %p142 = por %p140, %p141
      %s144 = sadd.s32 %s143, 1
      %p147 = scmp.eq.s32.totalorder %s20, 1
      %p148 = scmp.ne.s32.totalorder %s143, %s145
      %p149 = scmp.eq.s32.totalorder %s20, 0
      %p150 = por %p148, %p149
      %p151 = scmp.ne.s32.totalorder %s143, %s145
      %p152 = scmp.eq.s32.totalorder %s25, 1
      %p153 = por %p151, %p152
      %p154 = scmp.ne.s32.totalorder %s145, %s146
      %p155 = scmp.eq.s32.totalorder %s25, 0
      %p156 = por %p154, %p155
      %p157 = scmp.ne.s32.totalorder %s145, %s146
      %p158 = scmp.eq.s32.totalorder %s26, 1
      %p159 = por %p157, %p158
      %p161 = scmp.ne.s32.totalorder %s146, %s160
      %p162 = scmp.eq.s32.totalorder %s26, 0
      %p163 = por %p161, %p162
      %s165 = sadd.s32 %s164, 1
      %p168 = scmp.eq.s32.totalorder %s20, 1
      %p169 = scmp.ne.s32.totalorder %s164, %s166
      %p170 = scmp.eq.s32.totalorder %s20, 0
      %p171 = por %p169, %p170
      %p172 = scmp.ne.s32.totalorder %s164, %s166
      %p173 = scmp.eq.s32.totalorder %s25, 1
      %p174 = por %p172, %p173
      %p175 = scmp.ne.s32.totalorder %s166, %s167
      %p176 = scmp.eq.s32.totalorder %s25, 0
      %p177 = por %p175, %p176
      %p178 = scmp.ne.s32.totalorder %s166, %s167
      %p179 = scmp.eq.s32.totalorder %s26, 1
      %p180 = por %p178, %p179
      %p182 = scmp.ne.s32.totalorder %s167, %s181
      %p183 = scmp.eq.s32.totalorder %s26, 0
      %p184 = por %p182, %p183
      %s185 = ssub.s32 %s20, %s27
      %p186 = scmp.eq.s32.totalorder %s185, 0
      %s188 = sadd.s32 %s187, 1
      %s189 = scalar_select %p186, %s187, %s188
      %p192 = pneg %p186
      %p193 = scmp.eq.s32.totalorder %s20, 1
      %p194 = por %p192, %p193
      %p195 = scmp.ne.s32.totalorder %s187, %s190
      %p196 = scmp.eq.s32.totalorder %s20, 0
      %p197 = por %p195, %p196
      %p198 = scmp.ne.s32.totalorder %s187, %s190
      %p199 = scmp.eq.s32.totalorder %s25, 1
      %p200 = por %p198, %p199
      %p201 = scmp.ne.s32.totalorder %s190, %s191
      %p202 = scmp.eq.s32.totalorder %s25, 0
      %p203 = por %p201, %p202
      %p204 = scmp.ne.s32.totalorder %s190, %s191
      %p205 = scmp.eq.s32.totalorder %s26, 1
      %p206 = por %p204, %p205
      %p208 = scmp.ne.s32.totalorder %s191, %s207
      %p209 = scmp.eq.s32.totalorder %s26, 0
      %p210 = por %p208, %p209
      %p211 = scmp.le.s32.totalorder 1, %s20
      %p212 = scmp.lt.s32.totalorder %s20, 3
      %p213 = pnand %p211, %p212
      %p214 = pneg %p213
      // Predicated region
      $region9: #{tpu_custom_call.1} parent=5 // pred_check
        _
      $region10: #{tpu_custom_call.1} parent=5 // pred_check_branch
        %216 = sbr.rel (%p213) target = $region12
      $region11: #{tpu_custom_call.1} parent=5 // pred_region
        %s217 = ssub.s32 %s20, 1
        // Predicated region
        $region13: #{tpu_custom_call.1} parent=11 // pred_check
          %p218 = pneg %p93
        $region14: #{tpu_custom_call.1} parent=11 // pred_check_branch
          %220 = sbr.rel (%p218) target = $region16
        $region15: #{tpu_custom_call.1} parent=11 // pred_region
          %s222 = ssub.s32 4096, 4096
          %223 = vsyncadd [#allocation6], %s222
          %s224 = sshll.u32 [#allocation5], 4
          %s225 = int_to_ptr.vmem [resolvable:$true] %s224
          %230 = dma.hbm_to_vmem [thread:$0]  %s2, 4096, %s225, [#allocation6], 64, 64, 4
        $region16: #{tpu_custom_call.1} parent=11 // pred_fallthru
          _
        // Predicated region
        $region17: #{tpu_custom_call.1} parent=11 // pred_check
          %p231 = pneg %p114
        $region18: #{tpu_custom_call.1} parent=11 // pred_check_branch
          %233 = sbr.rel (%p231) target = $region20
        $region19: #{tpu_custom_call.1} parent=11 // pred_region
          _
        $region20: #{tpu_custom_call.1} parent=11 // pred_fallthru
          _
        // Predicated region
        $region21: #{tpu_custom_call.1} parent=11 // pred_check
          %p234 = pneg %p135
        $region22: #{tpu_custom_call.1} parent=11 // pred_check_branch
          %236 = sbr.rel (%p234) target = $region24
        $region23: #{tpu_custom_call.1} parent=11 // pred_region
          _
        $region24: #{tpu_custom_call.1} parent=11 // pred_fallthru
          _
        // Predicated region
        $region25: #{tpu_custom_call.1} parent=11 // pred_check
          %p237 = pneg %p156
        $region26: #{tpu_custom_call.1} parent=11 // pred_check_branch
          %239 = sbr.rel (%p237) target = $region28
        $region27: #{tpu_custom_call.1} parent=11 // pred_region
          %s241 = ssub.s32 2048, 2048
          %242 = vsyncadd [#allocation6], %s241
          %s243 = sshll.u32 [#allocation7], 4
          %s244 = int_to_ptr.vmem [resolvable:$true] %s243
          %249 = dma.hbm_to_vmem [thread:$0]  %s5, 2048, %s244, [#allocation6], 128, 128, 8
        $region28: #{tpu_custom_call.1} parent=11 // pred_fallthru
          _
        // Predicated region
        $region29: #{tpu_custom_call.1} parent=11 // pred_check
          %p250 = pneg %p177
        $region30: #{tpu_custom_call.1} parent=11 // pred_check_branch
          %252 = sbr.rel (%p250) target = $region32
        $region31: #{tpu_custom_call.1} parent=11 // pred_region
          _
        $region32: #{tpu_custom_call.1} parent=11 // pred_fallthru
          _
      $region12: #{tpu_custom_call.1} parent=5 // pred_fallthru
        _
      %p253 = scmp.lt.s32.totalorder %s20, 2
      // Predicated region
      $region33: #{tpu_custom_call.1} parent=5 // pred_check
        %p254 = pneg %p253
      $region34: #{tpu_custom_call.1} parent=5 // pred_check_branch
        %256 = sbr.rel (%p254) target = $region36
      $region35: #{tpu_custom_call.1} parent=5 // pred_region
        // Predicated region
        $region37: #{tpu_custom_call.1} parent=35 // pred_check
          %p257 = pneg %p40
        $region38: #{tpu_custom_call.1} parent=35 // pred_check_branch
          %259 = sbr.rel (%p257) target = $region40
        $region39: #{tpu_custom_call.1} parent=35 // pred_region
          %p260 = scmp.lt.s32.totalorder %s20, 1
          %s261 = scalar_select %p260, %s20, 1
          %s262 = smul.addr %s261, 8
          %s263 = scalar_lea.vmem %s0, %s262
        $region40: #{tpu_custom_call.1} parent=35 // pred_fallthru
          _
        // Predicated region
        $region41: #{tpu_custom_call.1} parent=35 // pred_check
          %p264 = pneg %p66
        $region42: #{tpu_custom_call.1} parent=35 // pred_check_branch
          %266 = sbr.rel (%p264) target = $region44
        $region43: #{tpu_custom_call.1} parent=35 // pred_region
          %s267 = sand.u32 %s56, 1
          %s268 = scalar_lea.sflag [#allocation3], %s267
          %s269 = sand.u32 %s56, 1
          %s270 = smul.addr %s269, 16
          %s271 = scalar_lea.vmem [#allocation2], %s270
          %s273 = ssub.s32 256, 256
          %274 = vsyncadd %s268, %s273
          %s275 = smul.addr %s20, 4
          %s276 = smul.addr %s275, 64
          %s277 = scalar_lea.hbm %s1, %s276
          %s279 = sshll.u32 %s271, 4
          %s280 = int_to_ptr.vmem [resolvable:$true] %s279
          %282 = dma.hbm_to_vmem [thread:$0]  %s277, 256, %s280, %s268
        $region44: #{tpu_custom_call.1} parent=35 // pred_fallthru
          _
      $region36: #{tpu_custom_call.1} parent=5 // pred_fallthru
        _
      %p283 = scmp.le.s32.totalorder 1, %s20
      %p284 = scmp.lt.s32.totalorder %s20, 3
      %p285 = pnand %p283, %p284
      %p286 = pneg %p285
      // Predicated region
      $region45: #{tpu_custom_call.1} parent=5 // pred_check
        _
      $region46: #{tpu_custom_call.1} parent=5 // pred_check_branch
        %288 = sbr.rel (%p285) target = $region48
      $region47: #{tpu_custom_call.1} parent=5 // pred_region
        %s289 = ssub.s32 %s20, 1
        %s290 = sand.u32 %s59, 1
        %s291 = scalar_lea.sflag [#allocation3], %s290
        %s292 = sand.u32 %s59, 1
        %s293 = smul.addr %s292, 16
        %s294 = scalar_lea.vmem [#allocation2], %s293
        // Predicated region
        $region49: #{tpu_custom_call.1} parent=47 // pred_check
          %p295 = pneg %p72
        $region50: #{tpu_custom_call.1} parent=47 // pred_check_branch
          %297 = sbr.rel (%p295) target = $region52
        $region51: #{tpu_custom_call.1} parent=47 // pred_region
          %298 = dma.done %s291, 256
        $region52: #{tpu_custom_call.1} parent=47 // pred_fallthru
          _
        // Predicated region
        $region53: #{tpu_custom_call.1} parent=47 // pred_check
          %p299 = pneg %p93
        $region54: #{tpu_custom_call.1} parent=47 // pred_check_branch
          %301 = sbr.rel (%p299) target = $region56
        $region55: #{tpu_custom_call.1} parent=47 // pred_region
          %302 = dma.done [#allocation6], 4096
        $region56: #{tpu_custom_call.1} parent=47 // pred_fallthru
          _
        // Predicated region
        $region57: #{tpu_custom_call.1} parent=47 // pred_check
          %p303 = pneg %p156
        $region58: #{tpu_custom_call.1} parent=47 // pred_check_branch
          %305 = sbr.rel (%p303) target = $region60
        $region59: #{tpu_custom_call.1} parent=47 // pred_region
          %306 = dma.done [#allocation6], 2048
        $region60: #{tpu_custom_call.1} parent=47 // pred_fallthru
          _
        %p307 = scmp.lt.s32.totalorder %s25, 1
        %s308 = scalar_select %p307, %s25, 1
        %s309 = smul.addr %s308, 8
        %s310 = scalar_lea.vmem %s0, %s309
        %p311 = pneg %p46
        %p312 = pneg %p43
        %s313 = sand.u32 %s59, 1
        %s314 = scalar_lea.sflag [#allocation3], %s313
        %s315 = sand.u32 %s59, 1
        %s316 = smul.addr %s315, 16
        %s317 = scalar_lea.vmem [#allocation2], %s316
        %p318 = pneg %p72
        %p319 = pneg %p69
        %p320 = pneg %p93
        %p321 = pneg %p90
        %p322 = pneg %p114
        %p323 = pneg %p111
        %p324 = pneg %p135
        %p325 = pneg %p132
        %p326 = pneg %p156
        %p327 = pneg %p153
        %p328 = pneg %p177
        %p329 = pneg %p174
        %p330 = pneg %p203
        %p331 = pneg %p200
        %s332 = sand.u32 %s190, 1
        %s333 = scalar_lea.sflag [#allocation4], %s332
        %s334 = sand.u32 %s190, 1
        %s335 = smul.addr %s334, 16
        %s336 = scalar_lea.vmem [#allocation8], %s335
        %p337 = scmp.lt.s32.totalorder %s25, 1
        %s338 = scalar_select %p337, %s25, 1
        %s339 = smul.addr %s338, 8
        %s340 = scalar_lea.vmem %s0, %s339
        %v342 = vld [vmem:[%s340] sm:$0xff]
        %v343 = vmul.f32 %v342, 2.0
        %v344 = vlog2.pop %v343
        %v345 = vmul.f32 %v344, 0.6931472
        %v346 = vmul.f32 %v345, 0.5
        %v347 = vadd.f32 %v346, 1.0
        %v348 = vld [vmem:[%s294] sm:$0xff]
        %v349 = vld [vmem:[%s294 + $0x8] sm:$0xff]
        %v350 = vld [vmem:[#allocation5] sm:$0xf]
        %v351 = vld [vmem:[#allocation5 + $0x4] sm:$0xf]
        %v352 = vld [vmem:[#allocation5 + $0x8] sm:$0xf]
        %v353 = vld [vmem:[#allocation5 + $0xc] sm:$0xf]
        %v354 = vld [vmem:[#allocation5 + $0x10] sm:$0xf]
        %v355 = vld [vmem:[#allocation5 + $0x14] sm:$0xf]
        %v356 = vld [vmem:[#allocation5 + $0x18] sm:$0xf]
        %v357 = vld [vmem:[#allocation5 + $0x1c] sm:$0xf]
        %v358 = vld [vmem:[#allocation5 + $0x20] sm:$0xf]
        %v359 = vld [vmem:[#allocation5 + $0x24] sm:$0xf]
        %v360 = vld [vmem:[#allocation5 + $0x28] sm:$0xf]
        %v361 = vld [vmem:[#allocation5 + $0x2c] sm:$0xf]
        %v362 = vld [vmem:[#allocation5 + $0x30] sm:$0xf]
        %v363 = vld [vmem:[#allocation5 + $0x34] sm:$0xf]
        %v364 = vld [vmem:[#allocation5 + $0x38] sm:$0xf]
        %v365 = vld [vmem:[#allocation5 + $0x3c] sm:$0xf]
        %v366 = vld [vmem:[#allocation5 + $0x40] sm:$0xf]
        %v367 = vld [vmem:[#allocation5 + $0x44] sm:$0xf]
        %v368 = vld [vmem:[#allocation5 + $0x48] sm:$0xf]
        %v369 = vld [vmem:[#allocation5 + $0x4c] sm:$0xf]
        %v370 = vld [vmem:[#allocation5 + $0x50] sm:$0xf]
        %v371 = vld [vmem:[#allocation5 + $0x54] sm:$0xf]
        %v372 = vld [vmem:[#allocation5 + $0x58] sm:$0xf]
        %v373 = vld [vmem:[#allocation5 + $0x5c] sm:$0xf]
        %v374 = vld [vmem:[#allocation5 + $0x60] sm:$0xf]
        %v375 = vld [vmem:[#allocation5 + $0x64] sm:$0xf]
        %v376 = vld [vmem:[#allocation5 + $0x68] sm:$0xf]
        %v377 = vld [vmem:[#allocation5 + $0x6c] sm:$0xf]
        %v378 = vld [vmem:[#allocation5 + $0x70] sm:$0xf]
        %v379 = vld [vmem:[#allocation5 + $0x74] sm:$0xf]
        %v380 = vld [vmem:[#allocation5 + $0x78] sm:$0xf]
        %v381 = vld [vmem:[#allocation5 + $0x7c] sm:$0xf]
        %v382 = vld [vmem:[#allocation5 + $0x80] sm:$0xf]
        %v383 = vld [vmem:[#allocation5 + $0x84] sm:$0xf]
        %v384 = vld [vmem:[#allocation5 + $0x88] sm:$0xf]
        %v385 = vld [vmem:[#allocation5 + $0x8c] sm:$0xf]
        %v386 = vld [vmem:[#allocation5 + $0x90] sm:$0xf]
        %v387 = vld [vmem:[#allocation5 + $0x94] sm:$0xf]
        %v388 = vld [vmem:[#allocation5 + $0x98] sm:$0xf]
        %v389 = vld [vmem:[#allocation5 + $0x9c] sm:$0xf]
        %v390 = vld [vmem:[#allocation5 + $0xa0] sm:$0xf]
        %v391 = vld [vmem:[#allocation5 + $0xa4] sm:$0xf]
        %v392 = vld [vmem:[#allocation5 + $0xa8] sm:$0xf]
        %v393 = vld [vmem:[#allocation5 + $0xac] sm:$0xf]
        %v394 = vld [vmem:[#allocation5 + $0xb0] sm:$0xf]
        %v395 = vld [vmem:[#allocation5 + $0xb4] sm:$0xf]
        %v396 = vld [vmem:[#allocation5 + $0xb8] sm:$0xf]
        %v397 = vld [vmem:[#allocation5 + $0xbc] sm:$0xf]
        %v398 = vld [vmem:[#allocation5 + $0xc0] sm:$0xf]
        %v399 = vld [vmem:[#allocation5 + $0xc4] sm:$0xf]
        %v400 = vld [vmem:[#allocation5 + $0xc8] sm:$0xf]
        %v401 = vld [vmem:[#allocation5 + $0xcc] sm:$0xf]
        %v402 = vld [vmem:[#allocation5 + $0xd0] sm:$0xf]
        %v403 = vld [vmem:[#allocation5 + $0xd4] sm:$0xf]
        %v404 = vld [vmem:[#allocation5 + $0xd8] sm:$0xf]
        %v405 = vld [vmem:[#allocation5 + $0xdc] sm:$0xf]
        %v406 = vld [vmem:[#allocation5 + $0xe0] sm:$0xf]
        %v407 = vld [vmem:[#allocation5 + $0xe4] sm:$0xf]
        %v408 = vld [vmem:[#allocation5 + $0xe8] sm:$0xf]
        %v409 = vld [vmem:[#allocation5 + $0xec] sm:$0xf]
        %v410 = vld [vmem:[#allocation5 + $0xf0] sm:$0xf]
        %v411 = vld [vmem:[#allocation5 + $0xf4] sm:$0xf]
        %v412 = vld [vmem:[#allocation5 + $0xf8] sm:$0xf]
        %v413 = vld [vmem:[#allocation5 + $0xfc] sm:$0xf]
        %v414 = vld [vmem:[%s3] sm:$0x1]
        %416 = vset.pattern.permute.xlu0 0
        %417 = vperm.xlu0 %416, %v347
        %v418 = vpop.permute.xlu0 %417
        %v421 = vlaneseq
        %v422 = vshrl.u32 %v421, 7
        %v423 = vsub.s32 0, %v422
        %v424 = vrot.slane %v414, %v423
        %v426 = vmul.f32 %v418, %v424
        %v429 = vunpack.c.l.b16 %v348
        %v430 = vunpack.c.h.b16 %v348
        %v431 = vunpack.c.l.b16 %v349
        %v432 = vunpack.c.h.b16 %v349
        %v433 = vpack.c.b16 %v429, %v429
        %v434 = vpack.c.b16 %v430, %v430
        %v435 = vpack.c.b16 %v431, %v431
        %v436 = vpack.c.b16 %v432, %v432
        %v505 = vunpack.c.l.b16 %v350
        %v506 = vunpack.c.l.b16 %v351
        %v507 = vunpack.c.l.b16 %v352
        %v508 = vunpack.c.l.b16 %v353
        %v509 = vunpack.c.l.b16 %v354
        %v510 = vunpack.c.l.b16 %v355
        %v511 = vunpack.c.l.b16 %v356
        %v512 = vunpack.c.l.b16 %v357
        %v513 = vunpack.c.l.b16 %v358
        %v514 = vunpack.c.l.b16 %v359
        %v515 = vunpack.c.l.b16 %v360
        %v516 = vunpack.c.l.b16 %v361
        %v517 = vunpack.c.l.b16 %v362
        %v518 = vunpack.c.l.b16 %v363
        %v519 = vunpack.c.l.b16 %v364
        %v520 = vunpack.c.l.b16 %v365
        %v521 = vunpack.c.l.b16 %v366
        %v522 = vunpack.c.l.b16 %v367
        %v523 = vunpack.c.l.b16 %v368
        %v524 = vunpack.c.l.b16 %v369
        %v525 = vunpack.c.l.b16 %v370
        %v526 = vunpack.c.l.b16 %v371
        %v527 = vunpack.c.l.b16 %v372
        %v528 = vunpack.c.l.b16 %v373
        %v529 = vunpack.c.l.b16 %v374
        %v530 = vunpack.c.l.b16 %v375
        %v531 = vunpack.c.l.b16 %v376
        %v532 = vunpack.c.l.b16 %v377
        %v533 = vunpack.c.l.b16 %v378
        %v534 = vunpack.c.l.b16 %v379
        %v535 = vunpack.c.l.b16 %v380
        %v536 = vunpack.c.l.b16 %v381
        %v537 = vunpack.c.l.b16 %v382
        %v538 = vunpack.c.l.b16 %v383
        %v539 = vunpack.c.l.b16 %v384
        %v540 = vunpack.c.l.b16 %v385
        %v541 = vunpack.c.l.b16 %v386
        %v542 = vunpack.c.l.b16 %v387
        %v543 = vunpack.c.l.b16 %v388
        %v544 = vunpack.c.l.b16 %v389
        %v545 = vunpack.c.l.b16 %v390
        %v546 = vunpack.c.l.b16 %v391
        %v547 = vunpack.c.l.b16 %v392
        %v548 = vunpack.c.l.b16 %v393
        %v549 = vunpack.c.l.b16 %v394
        %v550 = vunpack.c.l.b16 %v395
        %v551 = vunpack.c.l.b16 %v396
        %v552 = vunpack.c.l.b16 %v397
        %v553 = vunpack.c.l.b16 %v398
        %v554 = vunpack.c.l.b16 %v399
        %v555 = vunpack.c.l.b16 %v400
        %v556 = vunpack.c.l.b16 %v401
        %v557 = vunpack.c.l.b16 %v402
        %v558 = vunpack.c.l.b16 %v403
        %v559 = vunpack.c.l.b16 %v404
        %v560 = vunpack.c.l.b16 %v405
        %v561 = vunpack.c.l.b16 %v406
        %v562 = vunpack.c.l.b16 %v407
        %v563 = vunpack.c.l.b16 %v408
        %v564 = vunpack.c.l.b16 %v409
        %v565 = vunpack.c.l.b16 %v410
        %v566 = vunpack.c.l.b16 %v411
        %v567 = vunpack.c.l.b16 %v412
        %v568 = vunpack.c.l.b16 %v413
        %v569 = vpack.c.b16 %v506, %v505
        %v570 = vpack.c.b16 %v508, %v507
        %v571 = vpack.c.b16 %v510, %v509
        %v572 = vpack.c.b16 %v512, %v511
        %v573 = vpack.c.b16 %v514, %v513
        %v574 = vpack.c.b16 %v516, %v515
        %v575 = vpack.c.b16 %v518, %v517
        %v576 = vpack.c.b16 %v520, %v519
        %v577 = vpack.c.b16 %v522, %v521
        %v578 = vpack.c.b16 %v524, %v523
        %v579 = vpack.c.b16 %v526, %v525
        %v580 = vpack.c.b16 %v528, %v527
        %v581 = vpack.c.b16 %v530, %v529
        %v582 = vpack.c.b16 %v532, %v531
        %v583 = vpack.c.b16 %v534, %v533
        %v584 = vpack.c.b16 %v536, %v535
        %v585 = vpack.c.b16 %v538, %v537
        %v586 = vpack.c.b16 %v540, %v539
        %v587 = vpack.c.b16 %v542, %v541
        %v588 = vpack.c.b16 %v544, %v543
        %v589 = vpack.c.b16 %v546, %v545
        %v590 = vpack.c.b16 %v548, %v547
        %v591 = vpack.c.b16 %v550, %v549
        %v592 = vpack.c.b16 %v552, %v551
        %v593 = vpack.c.b16 %v554, %v553
        %v594 = vpack.c.b16 %v556, %v555
        %v595 = vpack.c.b16 %v558, %v557
        %v596 = vpack.c.b16 %v560, %v559
        %v597 = vpack.c.b16 %v562, %v561
        %v598 = vpack.c.b16 %v564, %v563
        %v599 = vpack.c.b16 %v566, %v565
        %v600 = vpack.c.b16 %v568, %v567
        %633 = vmatprep.subr.bf16.mxu0 0
        %634 = vmatpush1.bf16.msra.mxu0 %v576
        %635 = vmatprep.subr.bf16.mxu0 0
        %636 = vmatpush1.bf16.msra.mxu0 %v575
        %637 = vmatprep.subr.bf16.mxu0 0
        %638 = vmatpush1.bf16.msra.mxu0 %v574
        %639 = vmatprep.subr.bf16.mxu0 0
        %640 = vmatpush1.bf16.msra.mxu0 %v573
        %641 = vmatprep.subr.bf16.mxu0 0
        %642 = vmatpush1.bf16.msra.mxu0 %v572
        %643 = vmatprep.subr.bf16.mxu0 0
        %644 = vmatpush1.bf16.msra.mxu0 %v571
        %645 = vmatprep.subr.bf16.mxu0 0
        %646 = vmatpush1.bf16.msra.mxu0 %v570
        %647 = vmatprep.subr.bf16.mxu0 0
        %648 = vmatpush1.bf16.msra.mxu0 %v569
        %649 = vmatprep.subr.bf16.mxu0 0
        %650 = vmatpush2.bf16.msra.mxu0 %v584
        %651 = vmatprep.subr.bf16.mxu0 0
        %652 = vmatpush2.bf16.msra.mxu0 %v583
        %653 = vmatprep.subr.bf16.mxu0 0
        %654 = vmatpush2.bf16.msra.mxu0 %v582
        %655 = vmatprep.subr.bf16.mxu0 0
        %656 = vmatpush2.bf16.msra.mxu0 %v581
        %657 = vmatprep.subr.bf16.mxu0 0
        %658 = vmatpush2.bf16.msra.mxu0 %v580
        %659 = vmatprep.subr.bf16.mxu0 0
        %660 = vmatpush2.bf16.msra.mxu0 %v579
        %661 = vmatprep.subr.bf16.mxu0 0
        %662 = vmatpush2.bf16.msra.mxu0 %v578
        %663 = vmatprep.subr.bf16.mxu0 0
        %664 = vmatpush2.bf16.msra.mxu0 %v577
        %665 = vmatprep.mubr.bf16.mxu0 %v434
        %666 = vmatmul.mubr.bf16.gmra.mxu0 %v433
        %v667 = vpop.f32.mrf.mxu0
        %v668 = vadd.f32 %v426, %v667
        %v669 = vpop.f32.mrf.mxu0
        %v670 = vpop.f32.mrf.mxu0
        %v671 = vpop.f32.mrf.mxu0
        %672 = vdwg.mxu0
        %673 = vmatprep.subr.bf16.mxu0 0
        %674 = vmatpush1.bf16.msra.mxu0 %v592
        %675 = vmatprep.subr.bf16.mxu0 0
        %676 = vmatpush1.bf16.msra.mxu0 %v591
        %677 = vmatprep.subr.bf16.mxu0 0
        %678 = vmatpush1.bf16.msra.mxu0 %v590
        %679 = vmatprep.subr.bf16.mxu0 0
        %680 = vmatpush1.bf16.msra.mxu0 %v589
        %681 = vmatprep.subr.bf16.mxu0 0
        %682 = vmatpush1.bf16.msra.mxu0 %v588
        %683 = vmatprep.subr.bf16.mxu0 0
        %684 = vmatpush1.bf16.msra.mxu0 %v587
        %685 = vmatprep.subr.bf16.mxu0 0
        %686 = vmatpush1.bf16.msra.mxu0 %v586
        %687 = vmatprep.subr.bf16.mxu0 0
        %688 = vmatpush1.bf16.msra.mxu0 %v585
        %689 = vmatprep.subr.bf16.mxu0 0
        %690 = vmatpush2.bf16.msra.mxu0 %v600
        %691 = vmatprep.subr.bf16.mxu0 0
        %692 = vmatpush2.bf16.msra.mxu0 %v599
        %693 = vmatprep.subr.bf16.mxu0 0
        %694 = vmatpush2.bf16.msra.mxu0 %v598
        %695 = vmatprep.subr.bf16.mxu0 0
        %696 = vmatpush2.bf16.msra.mxu0 %v597
        %697 = vmatprep.subr.bf16.mxu0 0
        %698 = vmatpush2.bf16.msra.mxu0 %v596
        %699 = vmatprep.subr.bf16.mxu0 0
        %700 = vmatpush2.bf16.msra.mxu0 %v595
        %701 = vmatprep.subr.bf16.mxu0 0
        %702 = vmatpush2.bf16.msra.mxu0 %v594
        %703 = vmatprep.subr.bf16.mxu0 0
        %704 = vmatpush2.bf16.msra.mxu0 %v593
        %705 = vmatprep.mubr.bf16.mxu0 %v436
        %706 = vmatmul.mubr.bf16.gmra.mxu0 %v435
        %v707 = vpop.f32.mrf.mxu0
        %v708 = vadd.f32 %v668, %v707
        %v709 = vpop.f32.mrf.mxu0
        %v710 = vpop.f32.mrf.mxu0
        %v711 = vpop.f32.mrf.mxu0
        %712 = vdwg.mxu0
        %v713 = vld [vmem:[%s4] sm:$0x1]
        %v715 = vlaneseq
        %v716 = vshrl.u32 %v715, 7
        %v717 = vsub.s32 0, %v716
        %v718 = vrot.slane %v713, %v717
        %v720 = vadd.f32 %v708, %v718
        %v721 = vxor.u32 %v720, 2147483648
        %v722 = vmul.f32 %v721, 1.442695
        %v723 = vpow.pop %v722
        %v724 = vadd.f32 %v723, 1.0
        %v725 = vrcp.pop %v724
        %v726 = vmul.f32 1.0, %v725
        %v727 = vmul.f32 %v720, %v726
        %v728 = vpack.c.bf16 %v727, %v727
        %v729 = vld [vmem:[#allocation7] sm:$0xff]
        %v730 = vld [vmem:[#allocation7 + $0x8] sm:$0xff]
        %v731 = vld [vmem:[#allocation7 + $0x10] sm:$0xff]
        %v732 = vld [vmem:[#allocation7 + $0x18] sm:$0xff]
        %v733 = vld [vmem:[#allocation7 + $0x20] sm:$0xff]
        %v734 = vld [vmem:[#allocation7 + $0x28] sm:$0xff]
        %v735 = vld [vmem:[#allocation7 + $0x30] sm:$0xff]
        %v736 = vld [vmem:[#allocation7 + $0x38] sm:$0xff]
        %v737 = vld [vmem:[#allocation7 + $0x40] sm:$0xff]
        %v738 = vld [vmem:[#allocation7 + $0x48] sm:$0xff]
        %v739 = vld [vmem:[#allocation7 + $0x50] sm:$0xff]
        %v740 = vld [vmem:[#allocation7 + $0x58] sm:$0xff]
        %v741 = vld [vmem:[#allocation7 + $0x60] sm:$0xff]
        %v742 = vld [vmem:[#allocation7 + $0x68] sm:$0xff]
        %v743 = vld [vmem:[#allocation7 + $0x70] sm:$0xff]
        %v744 = vld [vmem:[#allocation7 + $0x78] sm:$0xff]
        %v745 = vld [vmem:[%s6] sm:$0x3]
        %v747 = vlaneseq
        %v748 = vshrl.u32 %v747, 7
        %v749 = vsub.s32 0, %v748
        %v750 = vrot.slane %v745, %v749
        %v751 = vlaneseq
        %v752 = vshrl.u32 %v751, 7
        %v753 = vsub.s32 1, %v752
        %v754 = vrot.slane %v745, %v753
        %v773 = vunpack.c.l.b16 %v729
        %v774 = vunpack.c.h.b16 %v729
        %v775 = vunpack.c.l.b16 %v730
        %v776 = vunpack.c.h.b16 %v730
        %v777 = vunpack.c.l.b16 %v731
        %v778 = vunpack.c.h.b16 %v731
        %v779 = vunpack.c.l.b16 %v732
        %v780 = vunpack.c.h.b16 %v732
        %v781 = vunpack.c.l.b16 %v733
        %v782 = vunpack.c.h.b16 %v733
        %v783 = vunpack.c.l.b16 %v734
        %v784 = vunpack.c.h.b16 %v734
        %v785 = vunpack.c.l.b16 %v735
        %v786 = vunpack.c.h.b16 %v735
        %v787 = vunpack.c.l.b16 %v736
        %v788 = vunpack.c.h.b16 %v736
        %v789 = vunpack.c.l.b16 %v737
        %v790 = vunpack.c.h.b16 %v737
        %v791 = vunpack.c.l.b16 %v738
        %v792 = vunpack.c.h.b16 %v738
        %v793 = vunpack.c.l.b16 %v739
        %v794 = vunpack.c.h.b16 %v739
        %v795 = vunpack.c.l.b16 %v740
        %v796 = vunpack.c.h.b16 %v740
        %v797 = vunpack.c.l.b16 %v741
        %v798 = vunpack.c.h.b16 %v741
        %v799 = vunpack.c.l.b16 %v742
        %v800 = vunpack.c.h.b16 %v742
        %v801 = vunpack.c.l.b16 %v743
        %v802 = vunpack.c.h.b16 %v743
        %v803 = vunpack.c.l.b16 %v744
        %v804 = vunpack.c.h.b16 %v744
        %v805 = vpack.c.b16 %v775, %v773
        %v806 = vpack.c.b16 %v776, %v774
        %v807 = vpack.c.b16 %v779, %v777
        %v808 = vpack.c.b16 %v780, %v778
        %v809 = vpack.c.b16 %v783, %v781
        %v810 = vpack.c.b16 %v784, %v782
        %v811 = vpack.c.b16 %v787, %v785
        %v812 = vpack.c.b16 %v788, %v786
        %v813 = vpack.c.b16 %v791, %v789
        %v814 = vpack.c.b16 %v792, %v790
        %v815 = vpack.c.b16 %v795, %v793
        %v816 = vpack.c.b16 %v796, %v794
        %v817 = vpack.c.b16 %v799, %v797
        %v818 = vpack.c.b16 %v800, %v798
        %v819 = vpack.c.b16 %v803, %v801
        %v820 = vpack.c.b16 %v804, %v802
        %837 = vmatprep.subr.bf16.mxu0 %v820
        %838 = vmatpush1.bf16.msra.mxu0 %v819
        %839 = vmatprep.subr.bf16.mxu0 %v818
        %840 = vmatpush1.bf16.msra.mxu0 %v817
        %841 = vmatprep.subr.bf16.mxu0 %v816
        %842 = vmatpush1.bf16.msra.mxu0 %v815
        %843 = vmatprep.subr.bf16.mxu0 %v814
        %844 = vmatpush1.bf16.msra.mxu0 %v813
        %845 = vmatprep.subr.bf16.mxu0 %v812
        %846 = vmatpush1.bf16.msra.mxu0 %v811
        %847 = vmatprep.subr.bf16.mxu0 %v810
        %848 = vmatpush1.bf16.msra.mxu0 %v809
        %849 = vmatprep.subr.bf16.mxu0 %v808
        %850 = vmatpush1.bf16.msra.mxu0 %v807
        %851 = vmatprep.subr.bf16.mxu0 %v806
        %852 = vmatpush1.bf16.msra.mxu0 %v805
        %853 = vmatprep.subr.bf16.mxu0 0
        %854 = vmatpush2.bf16.msra.mxu0 0
        %855 = vmatprep.subr.bf16.mxu0 0
        %856 = vmatpush2.bf16.msra.mxu0 0
        %857 = vmatprep.subr.bf16.mxu0 0
        %858 = vmatpush2.bf16.msra.mxu0 0
        %859 = vmatprep.subr.bf16.mxu0 0
        %860 = vmatpush2.bf16.msra.mxu0 0
        %861 = vmatprep.subr.bf16.mxu0 0
        %862 = vmatpush2.bf16.msra.mxu0 0
        %863 = vmatprep.subr.bf16.mxu0 0
        %864 = vmatpush2.bf16.msra.mxu0 0
        %865 = vmatprep.subr.bf16.mxu0 0
        %866 = vmatpush2.bf16.msra.mxu0 0
        %867 = vmatprep.subr.bf16.mxu0 0
        %868 = vmatpush2.bf16.msra.mxu0 0
        %869 = vmatprep.mubr.bf16.mxu0 0
        %870 = vmatmul.mubr.bf16.gmra.mxu0 %v728
        %v871 = vpop.f32.mrf.mxu0
        %v872 = vadd.f32 %v750, %v871
        %v873 = vpop.f32.mrf.mxu0
        %v874 = vadd.f32 %v754, %v873
        %v875 = vpop.f32.mrf.mxu0
        %v876 = vpop.f32.mrf.mxu0
        %877 = vdwg.mxu0
        %878 = vst [vmem:[%s336] sm:$0xff] %v872
        %879 = vst [vmem:[%s336 + $0x8] sm:$0xff] %v874
        %s880 = sand.u32 %s190, 1
        %s881 = scalar_lea.sflag [#allocation4], %s880
        %s882 = sand.u32 %s190, 1
        %s883 = smul.addr %s882, 16
        %s884 = scalar_lea.vmem [#allocation8], %s883
        // Predicated region
        $region61: #{tpu_custom_call.1} parent=47 // pred_check
          %p885 = pneg %p200
        $region62: #{tpu_custom_call.1} parent=47 // pred_check_branch
          %887 = sbr.rel (%p885) target = $region64
        $region63: #{tpu_custom_call.1} parent=47 // pred_region
          %s889 = ssub.s32 256, 256
          %890 = vsyncadd %s881, %s889
          %s891 = smul.addr %s25, 2
          %s892 = smul.addr %s891, 128
          %s893 = scalar_lea.hbm %s7, %s892
          %s895 = sshll.u32 %s884, 4
          %s896 = int_to_ptr.vmem [resolvable:$true] %s895
          %898 = dma.vmem_to_hbm [thread:$0]  %s896, 256, %s893, %s881
        $region64: #{tpu_custom_call.1} parent=47 // pred_fallthru
          _
      $region48: #{tpu_custom_call.1} parent=5 // pred_fallthru
        _
      %p899 = scmp.le.s32.totalorder 2, %s20
      // Predicated region
      $region65: #{tpu_custom_call.1} parent=5 // pred_check
        %p900 = pneg %p899
      $region66: #{tpu_custom_call.1} parent=5 // pred_check_branch
        %902 = sbr.rel (%p900) target = $region68
      $region67: #{tpu_custom_call.1} parent=5 // pred_region
        %s903 = ssub.s32 %s20, 2
        // Predicated region
        $region69: #{tpu_custom_call.1} parent=67 // pred_check
          %p904 = pneg %p206
        $region70: #{tpu_custom_call.1} parent=67 // pred_check_branch
          %906 = sbr.rel (%p904) target = $region72
        $region71: #{tpu_custom_call.1} parent=67 // pred_region
          %s907 = sand.u32 %s191, 1
          %s908 = scalar_lea.sflag [#allocation4], %s907
          %s909 = sand.u32 %s191, 1
          %s910 = smul.addr %s909, 16
          %s911 = scalar_lea.vmem [#allocation8], %s910
          %912 = dma.done %s908, 256
        $region72: #{tpu_custom_call.1} parent=67 // pred_fallthru
          _
      $region68: #{tpu_custom_call.1} parent=5 // pred_fallthru
        _
    $region6: #{tpu_custom_call.1} parent=1 // loop_footer
      %s24 = sadd.s32 1, %s20
    $region7: #{tpu_custom_call.1} parent=1 // loop_footer_branch
      %19 = sbr.rel target = $region3
    $region8: #{tpu_custom_call.1} parent=1 // loop_exit
      _
    %913 = vsyncpa [#allocation3], 1
    %s914 = scalar_lea.sflag [#allocation3], 1
    %915 = vsyncpa %s914, 1
    %916 = vsyncpa [#allocation6], 1
    %917 = vsyncpa [#allocation4], 1
    %s918 = scalar_lea.sflag [#allocation4], 1
    %919 = vsyncpa %s918, 1

// kernel: tpu_custom_call.1
$region0: #{tpu_custom_call.1}
  #allocation0 [shape = 'u32[]', space=smem, size = 0x4, offset = 0x4, fixed_abs, tag = 'smem constant byte address 0x4 - core index']
  #allocation1 [shape = 'u32[144,128]{1,0:T(1,128)}', space=vmem, size = 0x12000, scoped, tag = 'internal scratch']
  %s0 = inlined_call_operand.vmem [shape: f32[16,1], index: 0, kind: input, shape index: {}]
  %s1 = inlined_call_operand.hbm [shape: bf16[16,512], index: 1, kind: input, shape index: {}]
  %s2 = inlined_call_operand.hbm [shape: bf16[512,128], index: 2, kind: input, shape index: {}]
  %s3 = inlined_call_operand.vmem [shape: f32[1,128], index: 3, kind: input, shape index: {}]
  %s4 = inlined_call_operand.vmem [shape: f32[1,128], index: 4, kind: input, shape index: {}]
  %s5 = inlined_call_operand.hbm [shape: bf16[128,256], index: 5, kind: input, shape index: {}]
  %s6 = inlined_call_operand.vmem [shape: f32[1,256], index: 6, kind: input, shape index: {}]
  %s7 = inlined_call_operand.hbm [shape: f32[16,256], index: 7, kind: output, shape index: {}]
  %s8 = sld [smem:[#allocation0]]
  $region73: #{tpu_custom_call.1} parent=0
    _
  %s10 = ssub.s32 1, %s8
  %s11 = scalar_select 0, %s10, %s8
  $region1: #{tpu_custom_call.1} parent=0
    #allocation2 [shape = 'u8[16384]{0}', space=vmem, size = 0x4000, scoped, tag = 'input window, operand 1']
    #allocation3 [shape = 's32[2]{0}', space=sflag, size = 0x8, scoped, tag = 'scoped memory for tpu_custom_call.1']
    #allocation4 [shape = 's32[2]{0}', space=sflag, size = 0x8, scoped, tag = 'scoped memory for tpu_custom_call.1']
    #allocation5 [shape = 'u8[131072]{0}', space=vmem, size = 0x20000, scoped, tag = 'input window, operand 2, single buffered']
    #allocation6 [shape = 's32[1]{0}', space=sflag, size = 0x4, scoped, tag = 'scoped memory for tpu_custom_call.1']
    #allocation7 [shape = 'u8[65536]{0}', space=vmem, size = 0x10000, scoped, tag = 'input window, operand 5, single buffered']
    #allocation8 [shape = 'u8[16384]{0}', space=vmem, size = 0x4000, scoped, tag = 'output window, operand 0']
    %12 = vsyncpa [#allocation3], 0
    %s13 = scalar_lea.sflag [#allocation3], 1
    %14 = vsyncpa %s13, 0
    %15 = vsyncpa [#allocation6], 0
    %16 = vsyncpa [#allocation4], 0
    %s17 = scalar_lea.sflag [#allocation4], 1
    %18 = vsyncpa %s17, 0
    loop: start=0, step=1, limit=4
    $region2: #{tpu_custom_call.1} parent=1 // loop_pre_header
      _
    $region3: #{tpu_custom_call.1} parent=1 // loop_header
      %s20 = sphi 0, %s24
      %p21 = scmp.ge.s32.totalorder %s20, 4
      %s30 = sphi 0, %s32
      %s33 = sphi 0, %s30
      %s34 = sphi 0, %s33
      %s50 = sphi 0, %s34
      %s56 = sphi 0, %s58
      %s59 = sphi 0, %s56
      %s60 = sphi 0, %s59
      %s76 = sphi 0, %s60
      %s80 = sphi 0, %s80
      %s82 = sphi 0, %s80
      %s83 = sphi 0, %s82
      %s97 = sphi 0, %s83
      %s101 = sphi 0, %s101
      %s103 = sphi 0, %s101
      %s104 = sphi 0, %s103
      %s118 = sphi 0, %s104
      %s122 = sphi 0, %s122
      %s124 = sphi 0, %s122
      %s125 = sphi 0, %s124
      %s139 = sphi 0, %s125
      %s143 = sphi 0, %s143
      %s145 = sphi 0, %s143
      %s146 = sphi 0, %s145
      %s160 = sphi 0, %s146
      %s164 = sphi 0, %s164
      %s166 = sphi 0, %s164
      %s167 = sphi 0, %s166
      %s181 = sphi 0, %s167
      %s187 = sphi 0, %s189
      %s190 = sphi 0, %s187
      %s191 = sphi 0, %s190
      %s207 = sphi 0, %s191
    $region4: #{tpu_custom_call.1} parent=1 // loop_header_branch
      %23 = sbr.rel (%p21) target = $region8
    $region5: #{tpu_custom_call.1} parent=1 // loop_body
      %s25 = ssub.s32 %s20, 1
      %s26 = ssub.s32 %s20, 2
      %s27 = sadd.s32 %s20, 1
      %s28 = ssub.s32 %s20, %s27
      %p29 = scmp.eq.s32.totalorder %s28, 0
      %s31 = sadd.s32 %s30, 1
      %s32 = scalar_select %p29, %s30, %s31
      %p35 = pneg %p29
      %p36 = scmp.eq.s32.totalorder %s20, 1
      %p37 = por %p35, %p36
      %p38 = scmp.ne.s32.totalorder %s30, %s33
      %p39 = scmp.eq.s32.totalorder %s20, 0
      %p40 = por %p38, %p39
      %p41 = scmp.ne.s32.totalorder %s30, %s33
      %p42 = scmp.eq.s32.totalorder %s25, 1
      %p43 = por %p41, %p42
      %p44 = scmp.ne.s32.totalorder %s33, %s34
      %p45 = scmp.eq.s32.totalorder %s25, 0
      %p46 = por %p44, %p45
      %p47 = scmp.ne.s32.totalorder %s33, %s34
      %p48 = scmp.eq.s32.totalorder %s26, 1
      %p49 = por %p47, %p48
      %p51 = scmp.ne.s32.totalorder %s34, %s50
      %p52 = scmp.eq.s32.totalorder %s26, 0
      %p53 = por %p51, %p52
      %s54 = ssub.s32 %s20, %s27
      %p55 = scmp.eq.s32.totalorder %s54, 0
      %s57 = sadd.s32 %s56, 1
      %s58 = scalar_select %p55, %s56, %s57
      %p61 = pneg %p55
      %p62 = scmp.eq.s32.totalorder %s20, 1
      %p63 = por %p61, %p62
      %p64 = scmp.ne.s32.totalorder %s56, %s59
      %p65 = scmp.eq.s32.totalorder %s20, 0
      %p66 = por %p64, %p65
      %p67 = scmp.ne.s32.totalorder %s56, %s59
      %p68 = scmp.eq.s32.totalorder %s25, 1
      %p69 = por %p67, %p68
      %p70 = scmp.ne.s32.totalorder %s59, %s60
      %p71 = scmp.eq.s32.totalorder %s25, 0
      %p72 = por %p70, %p71
      %p73 = scmp.ne.s32.totalorder %s59, %s60
      %p74 = scmp.eq.s32.totalorder %s26, 1
      %p75 = por %p73, %p74
      %p77 = scmp.ne.s32.totalorder %s60, %s76
      %p78 = scmp.eq.s32.totalorder %s26, 0
      %p79 = por %p77, %p78
      %s81 = sadd.s32 %s80, 1
      %p84 = scmp.eq.s32.totalorder %s20, 1
      %p85 = scmp.ne.s32.totalorder %s80, %s82
      %p86 = scmp.eq.s32.totalorder %s20, 0
      %p87 = por %p85, %p86
      %p88 = scmp.ne.s32.totalorder %s80, %s82
      %p89 = scmp.eq.s32.totalorder %s25, 1
      %p90 = por %p88, %p89
      %p91 = scmp.ne.s32.totalorder %s82, %s83
      %p92 = scmp.eq.s32.totalorder %s25, 0
      %p93 = por %p91, %p92
      %p94 = scmp.ne.s32.totalorder %s82, %s83
      %p95 = scmp.eq.s32.totalorder %s26, 1
      %p96 = por %p94, %p95
      %p98 = scmp.ne.s32.totalorder %s83, %s97
      %p99 = scmp.eq.s32.totalorder %s26, 0
      %p100 = por %p98, %p99
      %s102 = sadd.s32 %s101, 1
      %p105 = scmp.eq.s32.totalorder %s20, 1
      %p106 = scmp.ne.s32.totalorder %s101, %s103
      %p107 = scmp.eq.s32.totalorder %s20, 0
      %p108 = por %p106, %p107
      %p109 = scmp.ne.s32.totalorder %s101, %s103
      %p110 = scmp.eq.s32.totalorder %s25, 1
      %p111 = por %p109, %p110
      %p112 = scmp.ne.s32.totalorder %s103, %s104
      %p113 = scmp.eq.s32.totalorder %s25, 0
      %p114 = por %p112, %p113
      %p115 = scmp.ne.s32.totalorder %s103, %s104
      %p116 = scmp.eq.s32.totalorder %s26, 1
      %p117 = por %p115, %p116
      %p119 = scmp.ne.s32.totalorder %s104, %s118
      %p120 = scmp.eq.s32.totalorder %s26, 0
      %p121 = por %p119, %p120
      %s123 = sadd.s32 %s122, 1
      %p126 = scmp.eq.s32.totalorder %s20, 1
      %p127 = scmp.ne.s32.totalorder %s122, %s124
      %p128 = scmp.eq.s32.totalorder %s20, 0
      %p129 = por %p127, %p128
      %p130 = scmp.ne.s32.totalorder %s122, %s124
      %p131 = scmp.eq.s32.totalorder %s25, 1
      %p132 = por %p130, %p131
      %p133 = scmp.ne.s32.totalorder %s124, %s125
      %p134 = scmp.eq.s32.totalorder %s25, 0
      %p135 = por %p133, %p134
      %p136 = scmp.ne.s32.totalorder %s124, %s125
      %p137 = scmp.eq.s32.totalorder %s26, 1
      %p138 = por %p136, %p137
      %p140 = scmp.ne.s32.totalorder %s125, %s139
      %p141 = scmp.eq.s32.totalorder %s26, 0
      %p142 = por %p140, %p141
      %s144 = sadd.s32 %s143, 1
      %p147 = scmp.eq.s32.totalorder %s20, 1
      %p148 = scmp.ne.s32.totalorder %s143, %s145
      %p149 = scmp.eq.s32.totalorder %s20, 0
      %p150 = por %p148, %p149
      %p151 = scmp.ne.s32.totalorder %s143, %s145
      %p152 = scmp.eq.s32.totalorder %s25, 1
      %p153 = por %p151, %p152
      %p154 = scmp.ne.s32.totalorder %s145, %s146
      %p155 = scmp.eq.s32.totalorder %s25, 0
      %p156 = por %p154, %p155
      %p157 = scmp.ne.s32.totalorder %s145, %s146
      %p158 = scmp.eq.s32.totalorder %s26, 1
      %p159 = por %p157, %p158
      %p161 = scmp.ne.s32.totalorder %s146, %s160
      %p162 = scmp.eq.s32.totalorder %s26, 0
      %p163 = por %p161, %p162
      %s165 = sadd.s32 %s164, 1
      %p168 = scmp.eq.s32.totalorder %s20, 1
      %p169 = scmp.ne.s32.totalorder %s164, %s166
      %p170 = scmp.eq.s32.totalorder %s20, 0
      %p171 = por %p169, %p170
      %p172 = scmp.ne.s32.totalorder %s164, %s166
      %p173 = scmp.eq.s32.totalorder %s25, 1
      %p174 = por %p172, %p173
      %p175 = scmp.ne.s32.totalorder %s166, %s167
      %p176 = scmp.eq.s32.totalorder %s25, 0
      %p177 = por %p175, %p176
      %p178 = scmp.ne.s32.totalorder %s166, %s167
      %p179 = scmp.eq.s32.totalorder %s26, 1
      %p180 = por %p178, %p179
      %p182 = scmp.ne.s32.totalorder %s167, %s181
      %p183 = scmp.eq.s32.totalorder %s26, 0
      %p184 = por %p182, %p183
      %s185 = ssub.s32 %s20, %s27
      %p186 = scmp.eq.s32.totalorder %s185, 0
      %s188 = sadd.s32 %s187, 1
      %s189 = scalar_select %p186, %s187, %s188
      %p192 = pneg %p186
      %p193 = scmp.eq.s32.totalorder %s20, 1
      %p194 = por %p192, %p193
      %p195 = scmp.ne.s32.totalorder %s187, %s190
      %p196 = scmp.eq.s32.totalorder %s20, 0
      %p197 = por %p195, %p196
      %p198 = scmp.ne.s32.totalorder %s187, %s190
      %p199 = scmp.eq.s32.totalorder %s25, 1
      %p200 = por %p198, %p199
      %p201 = scmp.ne.s32.totalorder %s190, %s191
      %p202 = scmp.eq.s32.totalorder %s25, 0
      %p203 = por %p201, %p202
      %p204 = scmp.ne.s32.totalorder %s190, %s191
      %p205 = scmp.eq.s32.totalorder %s26, 1
      %p206 = por %p204, %p205
      %p208 = scmp.ne.s32.totalorder %s191, %s207
      %p209 = scmp.eq.s32.totalorder %s26, 0
      %p210 = por %p208, %p209
      %p211 = scmp.le.s32.totalorder 1, %s20
      %p212 = scmp.lt.s32.totalorder %s20, 3
      %p213 = pnand %p211, %p212
      %p214 = pneg %p213
      // Predicated region
      $region9: #{tpu_custom_call.1} parent=5 // pred_check
        _
      $region10: #{tpu_custom_call.1} parent=5 // pred_check_branch
        %216 = sbr.rel (%p213) target = $region12
      $region11: #{tpu_custom_call.1} parent=5 // pred_region
        %s217 = ssub.s32 %s20, 1
        // Predicated region
        $region13: #{tpu_custom_call.1} parent=11 // pred_check
          %p218 = pneg %p93
        $region14: #{tpu_custom_call.1} parent=11 // pred_check_branch
          %220 = sbr.rel (%p218) target = $region16
        $region15: #{tpu_custom_call.1} parent=11 // pred_region
          %s222 = ssub.s32 4096, 4096
          %223 = vsyncadd [#allocation6], %s222
          %s224 = sshll.u32 [#allocation5], 4
          %s225 = int_to_ptr.vmem [resolvable:$true] %s224
          %230 = dma.hbm_to_vmem [thread:$0]  %s2, 4096, %s225, [#allocation6], 64, 64, 4
        $region16: #{tpu_custom_call.1} parent=11 // pred_fallthru
          _
        // Predicated region
        $region17: #{tpu_custom_call.1} parent=11 // pred_check
          %p231 = pneg %p114
        $region18: #{tpu_custom_call.1} parent=11 // pred_check_branch
          %233 = sbr.rel (%p231) target = $region20
        $region19: #{tpu_custom_call.1} parent=11 // pred_region
          _
        $region20: #{tpu_custom_call.1} parent=11 // pred_fallthru
          _
        // Predicated region
        $region21: #{tpu_custom_call.1} parent=11 // pred_check
          %p234 = pneg %p135
        $region22: #{tpu_custom_call.1} parent=11 // pred_check_branch
          %236 = sbr.rel (%p234) target = $region24
        $region23: #{tpu_custom_call.1} parent=11 // pred_region
          _
        $region24: #{tpu_custom_call.1} parent=11 // pred_fallthru
          _
        // Predicated region
        $region25: #{tpu_custom_call.1} parent=11 // pred_check
          %p237 = pneg %p156
        $region26: #{tpu_custom_call.1} parent=11 // pred_check_branch
          %239 = sbr.rel (%p237) target = $region28
        $region27: #{tpu_custom_call.1} parent=11 // pred_region
          %s241 = ssub.s32 2048, 2048
          %242 = vsyncadd [#allocation6], %s241
          %s243 = sshll.u32 [#allocation7], 4
          %s244 = int_to_ptr.vmem [resolvable:$true] %s243
          %249 = dma.hbm_to_vmem [thread:$0]  %s5, 2048, %s244, [#allocation6], 128, 128, 8
        $region28: #{tpu_custom_call.1} parent=11 // pred_fallthru
          _
        // Predicated region
        $region29: #{tpu_custom_call.1} parent=11 // pred_check
          %p250 = pneg %p177
        $region30: #{tpu_custom_call.1} parent=11 // pred_check_branch
          %252 = sbr.rel (%p250) target = $region32
        $region31: #{tpu_custom_call.1} parent=11 // pred_region
          _
        $region32: #{tpu_custom_call.1} parent=11 // pred_fallthru
          _
      $region12: #{tpu_custom_call.1} parent=5 // pred_fallthru
        _
      %p253 = scmp.lt.s32.totalorder %s20, 2
      // Predicated region
      $region33: #{tpu_custom_call.1} parent=5 // pred_check
        %p254 = pneg %p253
      $region34: #{tpu_custom_call.1} parent=5 // pred_check_branch
        %256 = sbr.rel (%p254) target = $region36
      $region35: #{tpu_custom_call.1} parent=5 // pred_region
        // Predicated region
        $region37: #{tpu_custom_call.1} parent=35 // pred_check
          %p257 = pneg %p40
        $region38: #{tpu_custom_call.1} parent=35 // pred_check_branch
          %259 = sbr.rel (%p257) target = $region40
        $region39: #{tpu_custom_call.1} parent=35 // pred_region
          %p260 = scmp.lt.s32.totalorder %s20, 1
          %s261 = scalar_select %p260, %s20, 1
          %s262 = smul.addr %s261, 8
          %s263 = scalar_lea.vmem %s0, %s262
        $region40: #{tpu_custom_call.1} parent=35 // pred_fallthru
          _
        // Predicated region
        $region41: #{tpu_custom_call.1} parent=35 // pred_check
          %p264 = pneg %p66
        $region42: #{tpu_custom_call.1} parent=35 // pred_check_branch
          %266 = sbr.rel (%p264) target = $region44
        $region43: #{tpu_custom_call.1} parent=35 // pred_region
          %s267 = sand.u32 %s56, 1
          %s268 = scalar_lea.sflag [#allocation3], %s267
          %s269 = sand.u32 %s56, 1
          %s270 = smul.addr %s269, 16
          %s271 = scalar_lea.vmem [#allocation2], %s270
          %s273 = ssub.s32 256, 256
          %274 = vsyncadd %s268, %s273
          %s275 = smul.addr %s20, 4
          %s276 = smul.addr %s275, 64
          %s277 = scalar_lea.hbm %s1, %s276
          %s279 = sshll.u32 %s271, 4
          %s280 = int_to_ptr.vmem [resolvable:$true] %s279
          %282 = dma.hbm_to_vmem [thread:$0]  %s277, 256, %s280, %s268
        $region44: #{tpu_custom_call.1} parent=35 // pred_fallthru
          _
      $region36: #{tpu_custom_call.1} parent=5 // pred_fallthru
        _
      %p283 = scmp.le.s32.totalorder 1, %s20
      %p284 = scmp.lt.s32.totalorder %s20, 3
      %p285 = pnand %p283, %p284
      %p286 = pneg %p285
      // Predicated region
      $region45: #{tpu_custom_call.1} parent=5 // pred_check
        _
      $region46: #{tpu_custom_call.1} parent=5 // pred_check_branch
        %288 = sbr.rel (%p285) target = $region48
      $region47: #{tpu_custom_call.1} parent=5 // pred_region
        %s289 = ssub.s32 %s20, 1
        %s290 = sand.u32 %s59, 1
        %s291 = scalar_lea.sflag [#allocation3], %s290
        %s292 = sand.u32 %s59, 1
        %s293 = smul.addr %s292, 16
        %s294 = scalar_lea.vmem [#allocation2], %s293
        // Predicated region
        $region49: #{tpu_custom_call.1} parent=47 // pred_check
          %p295 = pneg %p72
        $region50: #{tpu_custom_call.1} parent=47 // pred_check_branch
          %297 = sbr.rel (%p295) target = $region52
        $region51: #{tpu_custom_call.1} parent=47 // pred_region
          %298 = dma.done %s291, 256
        $region52: #{tpu_custom_call.1} parent=47 // pred_fallthru
          _
        // Predicated region
        $region53: #{tpu_custom_call.1} parent=47 // pred_check
          %p299 = pneg %p93
        $region54: #{tpu_custom_call.1} parent=47 // pred_check_branch
          %301 = sbr.rel (%p299) target = $region56
        $region55: #{tpu_custom_call.1} parent=47 // pred_region
          %302 = dma.done [#allocation6], 4096
        $region56: #{tpu_custom_call.1} parent=47 // pred_fallthru
          _
        // Predicated region
        $region57: #{tpu_custom_call.1} parent=47 // pred_check
          %p303 = pneg %p156
        $region58: #{tpu_custom_call.1} parent=47 // pred_check_branch
          %305 = sbr.rel (%p303) target = $region60
        $region59: #{tpu_custom_call.1} parent=47 // pred_region
          %306 = dma.done [#allocation6], 2048
        $region60: #{tpu_custom_call.1} parent=47 // pred_fallthru
          _
        %p307 = scmp.lt.s32.totalorder %s25, 1
        %s308 = scalar_select %p307, %s25, 1
        %s309 = smul.addr %s308, 8
        %s310 = scalar_lea.vmem %s0, %s309
        %p311 = pneg %p46
        %p312 = pneg %p43
        %s313 = sand.u32 %s59, 1
        %s314 = scalar_lea.sflag [#allocation3], %s313
        %s315 = sand.u32 %s59, 1
        %s316 = smul.addr %s315, 16
        %s317 = scalar_lea.vmem [#allocation2], %s316
        %p318 = pneg %p72
        %p319 = pneg %p69
        %p320 = pneg %p93
        %p321 = pneg %p90
        %p322 = pneg %p114
        %p323 = pneg %p111
        %p324 = pneg %p135
        %p325 = pneg %p132
        %p326 = pneg %p156
        %p327 = pneg %p153
        %p328 = pneg %p177
        %p329 = pneg %p174
        %p330 = pneg %p203
        %p331 = pneg %p200
        %s332 = sand.u32 %s190, 1
        %s333 = scalar_lea.sflag [#allocation4], %s332
        %s334 = sand.u32 %s190, 1
        %s335 = smul.addr %s334, 16
        %s336 = scalar_lea.vmem [#allocation8], %s335
        %p337 = scmp.lt.s32.totalorder %s25, 1
        %s338 = scalar_select %p337, %s25, 1
        %s339 = smul.addr %s338, 8
        %s340 = scalar_lea.vmem %s0, %s339
        %v342 = vld [vmem:[%s340] sm:$0xff]
        %v343 = vmul.f32 %v342, 2.0
        %v344 = vlog2.pop %v343
        %v345 = vmul.f32 %v344, 0.6931472
        %v346 = vmul.f32 %v345, 0.5
        %v347 = vadd.f32 %v346, 1.0
        %v348 = vld [vmem:[%s294] sm:$0xff]
        %v349 = vld [vmem:[%s294 + $0x8] sm:$0xff]
        %v350 = vld [vmem:[#allocation5] sm:$0xf]
        %v351 = vld [vmem:[#allocation5 + $0x4] sm:$0xf]
        %v352 = vld [vmem:[#allocation5 + $0x8] sm:$0xf]
        %v353 = vld [vmem:[#allocation5 + $0xc] sm:$0xf]
        %v354 = vld [vmem:[#allocation5 + $0x10] sm:$0xf]
        %v355 = vld [vmem:[#allocation5 + $0x14] sm:$0xf]
        %v356 = vld [vmem:[#allocation5 + $0x18] sm:$0xf]
        %v357 = vld [vmem:[#allocation5 + $0x1c] sm:$0xf]
        %v358 = vld [vmem:[#allocation5 + $0x20] sm:$0xf]
        %v359 = vld [vmem:[#allocation5 + $0x24] sm:$0xf]
        %v360 = vld [vmem:[#allocation5 + $0x28] sm:$0xf]
        %v361 = vld [vmem:[#allocation5 + $0x2c] sm:$0xf]
        %v362 = vld [vmem:[#allocation5 + $0x30] sm:$0xf]
        %v363 = vld [vmem:[#allocation5 + $0x34] sm:$0xf]
        %v364 = vld [vmem:[#allocation5 + $0x38] sm:$0xf]
        %v365 = vld [vmem:[#allocation5 + $0x3c] sm:$0xf]
        %v366 = vld [vmem:[#allocation5 + $0x40] sm:$0xf]
        %v367 = vld [vmem:[#allocation5 + $0x44] sm:$0xf]
        %v368 = vld [vmem:[#allocation5 + $0x48] sm:$0xf]
        %v369 = vld [vmem:[#allocation5 + $0x4c] sm:$0xf]
        %v370 = vld [vmem:[#allocation5 + $0x50] sm:$0xf]
        %v371 = vld [vmem:[#allocation5 + $0x54] sm:$0xf]
        %v372 = vld [vmem:[#allocation5 + $0x58] sm:$0xf]
        %v373 = vld [vmem:[#allocation5 + $0x5c] sm:$0xf]
        %v374 = vld [vmem:[#allocation5 + $0x60] sm:$0xf]
        %v375 = vld [vmem:[#allocation5 + $0x64] sm:$0xf]
        %v376 = vld [vmem:[#allocation5 + $0x68] sm:$0xf]
        %v377 = vld [vmem:[#allocation5 + $0x6c] sm:$0xf]
        %v378 = vld [vmem:[#allocation5 + $0x70] sm:$0xf]
        %v379 = vld [vmem:[#allocation5 + $0x74] sm:$0xf]
        %v380 = vld [vmem:[#allocation5 + $0x78] sm:$0xf]
        %v381 = vld [vmem:[#allocation5 + $0x7c] sm:$0xf]
        %v382 = vld [vmem:[#allocation5 + $0x80] sm:$0xf]
        %v383 = vld [vmem:[#allocation5 + $0x84] sm:$0xf]
        %v384 = vld [vmem:[#allocation5 + $0x88] sm:$0xf]
        %v385 = vld [vmem:[#allocation5 + $0x8c] sm:$0xf]
        %v386 = vld [vmem:[#allocation5 + $0x90] sm:$0xf]
        %v387 = vld [vmem:[#allocation5 + $0x94] sm:$0xf]
        %v388 = vld [vmem:[#allocation5 + $0x98] sm:$0xf]
        %v389 = vld [vmem:[#allocation5 + $0x9c] sm:$0xf]
        %v390 = vld [vmem:[#allocation5 + $0xa0] sm:$0xf]
        %v391 = vld [vmem:[#allocation5 + $0xa4] sm:$0xf]
        %v392 = vld [vmem:[#allocation5 + $0xa8] sm:$0xf]
        %v393 = vld [vmem:[#allocation5 + $0xac] sm:$0xf]
        %v394 = vld [vmem:[#allocation5 + $0xb0] sm:$0xf]
        %v395 = vld [vmem:[#allocation5 + $0xb4] sm:$0xf]
        %v396 = vld [vmem:[#allocation5 + $0xb8] sm:$0xf]
        %v397 = vld [vmem:[#allocation5 + $0xbc] sm:$0xf]
        %v398 = vld [vmem:[#allocation5 + $0xc0] sm:$0xf]
        %v399 = vld [vmem:[#allocation5 + $0xc4] sm:$0xf]
        %v400 = vld [vmem:[#allocation5 + $0xc8] sm:$0xf]
        %v401 = vld [vmem:[#allocation5 + $0xcc] sm:$0xf]
        %v402 = vld [vmem:[#allocation5 + $0xd0] sm:$0xf]
        %v403 = vld [vmem:[#allocation5 + $0xd4] sm:$0xf]
        %v404 = vld [vmem:[#allocation5 + $0xd8] sm:$0xf]
        %v405 = vld [vmem:[#allocation5 + $0xdc] sm:$0xf]
        %v406 = vld [vmem:[#allocation5 + $0xe0] sm:$0xf]
        %v407 = vld [vmem:[#allocation5 + $0xe4] sm:$0xf]
        %v408 = vld [vmem:[#allocation5 + $0xe8] sm:$0xf]
        %v409 = vld [vmem:[#allocation5 + $0xec] sm:$0xf]
        %v410 = vld [vmem:[#allocation5 + $0xf0] sm:$0xf]
        %v411 = vld [vmem:[#allocation5 + $0xf4] sm:$0xf]
        %v412 = vld [vmem:[#allocation5 + $0xf8] sm:$0xf]
        %v413 = vld [vmem:[#allocation5 + $0xfc] sm:$0xf]
        %v414 = vld [vmem:[%s3] sm:$0x1]
        %416 = vset.pattern.permute.xlu0 0
        %417 = vperm.xlu0 %416, %v347
        %v418 = vpop.permute.xlu0 %417
        %v421 = vlaneseq
        %v422 = vshrl.u32 %v421, 7
        %v423 = vsub.s32 0, %v422
        %v424 = vrot.slane %v414, %v423
        %v426 = vmul.f32 %v418, %v424
        %v429 = vunpack.c.l.b16 %v348
        %v430 = vunpack.c.h.b16 %v348
        %v431 = vunpack.c.l.b16 %v349
        %v432 = vunpack.c.h.b16 %v349
        %v433 = vpack.c.b16 %v429, %v429
        %v434 = vpack.c.b16 %v430, %v430
        %v435 = vpack.c.b16 %v431, %v431
        %v436 = vpack.c.b16 %v432, %v432
        %v505 = vunpack.c.l.b16 %v350
        %v506 = vunpack.c.l.b16 %v351
        %v507 = vunpack.c.l.b16 %v352
        %v508 = vunpack.c.l.b16 %v353
        %v509 = vunpack.c.l.b16 %v354
        %v510 = vunpack.c.l.b16 %v355
        %v511 = vunpack.c.l.b16 %v356
        %v512 = vunpack.c.l.b16 %v357
        %v513 = vunpack.c.l.b16 %v358
        %v514 = vunpack.c.l.b16 %v359
        %v515 = vunpack.c.l.b16 %v360
        %v516 = vunpack.c.l.b16 %v361
        %v517 = vunpack.c.l.b16 %v362
        %v518 = vunpack.c.l.b16 %v363
        %v519 = vunpack.c.l.b16 %v364
        %v520 = vunpack.c.l.b16 %v365
        %v521 = vunpack.c.l.b16 %v366
        %v522 = vunpack.c.l.b16 %v367
        %v523 = vunpack.c.l.b16 %v368
        %v524 = vunpack.c.l.b16 %v369
        %v525 = vunpack.c.l.b16 %v370
        %v526 = vunpack.c.l.b16 %v371
        %v527 = vunpack.c.l.b16 %v372
        %v528 = vunpack.c.l.b16 %v373
        %v529 = vunpack.c.l.b16 %v374
        %v530 = vunpack.c.l.b16 %v375
        %v531 = vunpack.c.l.b16 %v376
        %v532 = vunpack.c.l.b16 %v377
        %v533 = vunpack.c.l.b16 %v378
        %v534 = vunpack.c.l.b16 %v379
        %v535 = vunpack.c.l.b16 %v380
        %v536 = vunpack.c.l.b16 %v381
        %v537 = vunpack.c.l.b16 %v382
        %v538 = vunpack.c.l.b16 %v383
        %v539 = vunpack.c.l.b16 %v384
        %v540 = vunpack.c.l.b16 %v385
        %v541 = vunpack.c.l.b16 %v386
        %v542 = vunpack.c.l.b16 %v387
        %v543 = vunpack.c.l.b16 %v388
        %v544 = vunpack.c.l.b16 %v389
        %v545 = vunpack.c.l.b16 %v390
        %v546 = vunpack.c.l.b16 %v391
        %v547 = vunpack.c.l.b16 %v392
        %v548 = vunpack.c.l.b16 %v393
        %v549 = vunpack.c.l.b16 %v394
        %v550 = vunpack.c.l.b16 %v395
        %v551 = vunpack.c.l.b16 %v396
        %v552 = vunpack.c.l.b16 %v397
        %v553 = vunpack.c.l.b16 %v398
        %v554 = vunpack.c.l.b16 %v399
        %v555 = vunpack.c.l.b16 %v400
        %v556 = vunpack.c.l.b16 %v401
        %v557 = vunpack.c.l.b16 %v402
        %v558 = vunpack.c.l.b16 %v403
        %v559 = vunpack.c.l.b16 %v404
        %v560 = vunpack.c.l.b16 %v405
        %v561 = vunpack.c.l.b16 %v406
        %v562 = vunpack.c.l.b16 %v407
        %v563 = vunpack.c.l.b16 %v408
        %v564 = vunpack.c.l.b16 %v409
        %v565 = vunpack.c.l.b16 %v410
        %v566 = vunpack.c.l.b16 %v411
        %v567 = vunpack.c.l.b16 %v412
        %v568 = vunpack.c.l.b16 %v413
        %v569 = vpack.c.b16 %v506, %v505
        %v570 = vpack.c.b16 %v508, %v507
        %v571 = vpack.c.b16 %v510, %v509
        %v572 = vpack.c.b16 %v512, %v511
        %v573 = vpack.c.b16 %v514, %v513
        %v574 = vpack.c.b16 %v516, %v515
        %v575 = vpack.c.b16 %v518, %v517
        %v576 = vpack.c.b16 %v520, %v519
        %v577 = vpack.c.b16 %v522, %v521
        %v578 = vpack.c.b16 %v524, %v523
        %v579 = vpack.c.b16 %v526, %v525
        %v580 = vpack.c.b16 %v528, %v527
        %v581 = vpack.c.b16 %v530, %v529
        %v582 = vpack.c.b16 %v532, %v531
        %v583 = vpack.c.b16 %v534, %v533
        %v584 = vpack.c.b16 %v536, %v535
        %v585 = vpack.c.b16 %v538, %v537
        %v586 = vpack.c.b16 %v540, %v539
        %v587 = vpack.c.b16 %v542, %v541
        %v588 = vpack.c.b16 %v544, %v543
        %v589 = vpack.c.b16 %v546, %v545
        %v590 = vpack.c.b16 %v548, %v547
        %v591 = vpack.c.b16 %v550, %v549
        %v592 = vpack.c.b16 %v552, %v551
        %v593 = vpack.c.b16 %v554, %v553
        %v594 = vpack.c.b16 %v556, %v555
        %v595 = vpack.c.b16 %v558, %v557
        %v596 = vpack.c.b16 %v560, %v559
        %v597 = vpack.c.b16 %v562, %v561
        %v598 = vpack.c.b16 %v564, %v563
        %v599 = vpack.c.b16 %v566, %v565
        %v600 = vpack.c.b16 %v568, %v567
        %633 = vmatprep.subr.bf16.mxu0 0
        %634 = vmatpush1.bf16.msra.mxu0 %v576
        %635 = vmatprep.subr.bf16.mxu0 0
        %636 = vmatpush1.bf16.msra.mxu0 %v575
        %637 = vmatprep.subr.bf16.mxu0 0
        %638 = vmatpush1.bf16.msra.mxu0 %v574
        %639 = vmatprep.subr.bf16.mxu0 0
        %640 = vmatpush1.bf16.msra.mxu0 %v573
        %641 = vmatprep.subr.bf16.mxu0 0
        %642 = vmatpush1.bf16.msra.mxu0 %v572
        %643 = vmatprep.subr.bf16.mxu0 0
        %644 = vmatpush1.bf16.msra.mxu0 %v571
        %645 = vmatprep.subr.bf16.mxu0 0
        %646 = vmatpush1.bf16.msra.mxu0 %v570
        %647 = vmatprep.subr.bf16.mxu0 0
        %648 = vmatpush1.bf16.msra.mxu0 %v569
        %649 = vmatprep.subr.bf16.mxu0 0
        %650 = vmatpush2.bf16.msra.mxu0 %v584
        %651 = vmatprep.subr.bf16.mxu0 0
        %652 = vmatpush2.bf16.msra.mxu0 %v583
        %653 = vmatprep.subr.bf16.mxu0 0
        %654 = vmatpush2.bf16.msra.mxu0 %v582
        %655 = vmatprep.subr.bf16.mxu0 0
        %656 = vmatpush2.bf16.msra.mxu0 %v581
        %657 = vmatprep.subr.bf16.mxu0 0
        %658 = vmatpush2.bf16.msra.mxu0 %v580
        %659 = vmatprep.subr.bf16.mxu0 0
        %660 = vmatpush2.bf16.msra.mxu0 %v579
        %661 = vmatprep.subr.bf16.mxu0 0
        %662 = vmatpush2.bf16.msra.mxu0 %v578
        %663 = vmatprep.subr.bf16.mxu0 0
        %664 = vmatpush2.bf16.msra.mxu0 %v577
        %665 = vmatprep.mubr.bf16.mxu0 %v434
        %666 = vmatmul.mubr.bf16.gmra.mxu0 %v433
        %v667 = vpop.f32.mrf.mxu0
        %v668 = vadd.f32 %v426, %v667
        %v669 = vpop.f32.mrf.mxu0
        %v670 = vpop.f32.mrf.mxu0
        %v671 = vpop.f32.mrf.mxu0
        %672 = vdwg.mxu0
        %673 = vmatprep.subr.bf16.mxu0 0
        %674 = vmatpush1.bf16.msra.mxu0 %v592
        %675 = vmatprep.subr.bf16.mxu0 0
        %676 = vmatpush1.bf16.msra.mxu0 %v591
        %677 = vmatprep.subr.bf16.mxu0 0
        %678 = vmatpush1.bf16.msra.mxu0 %v590
        %679 = vmatprep.subr.bf16.mxu0 0
        %680 = vmatpush1.bf16.msra.mxu0 %v589
        %681 = vmatprep.subr.bf16.mxu0 0
        %682 = vmatpush1.bf16.msra.mxu0 %v588
        %683 = vmatprep.subr.bf16.mxu0 0
        %684 = vmatpush1.bf16.msra.mxu0 %v587
        %685 = vmatprep.subr.bf16.mxu0 0
        %686 = vmatpush1.bf16.msra.mxu0 %v586
        %687 = vmatprep.subr.bf16.mxu0 0
        %688 = vmatpush1.bf16.msra.mxu0 %v585
        %689 = vmatprep.subr.bf16.mxu0 0
        %690 = vmatpush2.bf16.msra.mxu0 %v600
        %691 = vmatprep.subr.bf16.mxu0 0
        %692 = vmatpush2.bf16.msra.mxu0 %v599
        %693 = vmatprep.subr.bf16.mxu0 0
        %694 = vmatpush2.bf16.msra.mxu0 %v598
        %695 = vmatprep.subr.bf16.mxu0 0
        %696 = vmatpush2.bf16.msra.mxu0 %v597
        %697 = vmatprep.subr.bf16.mxu0 0
        %698 = vmatpush2.bf16.msra.mxu0 %v596
        %699 = vmatprep.subr.bf16.mxu0 0
        %700 = vmatpush2.bf16.msra.mxu0 %v595
        %701 = vmatprep.subr.bf16.mxu0 0
        %702 = vmatpush2.bf16.msra.mxu0 %v594
        %703 = vmatprep.subr.bf16.mxu0 0
        %704 = vmatpush2.bf16.msra.mxu0 %v593
        %705 = vmatprep.mubr.bf16.mxu0 %v436
        %706 = vmatmul.mubr.bf16.gmra.mxu0 %v435
        %v707 = vpop.f32.mrf.mxu0
        %v708 = vadd.f32 %v668, %v707
        %v709 = vpop.f32.mrf.mxu0
        %v710 = vpop.f32.mrf.mxu0
        %v711 = vpop.f32.mrf.mxu0
        %712 = vdwg.mxu0
        %v713 = vld [vmem:[%s4] sm:$0x1]
        %v715 = vlaneseq
        %v716 = vshrl.u32 %v715, 7
        %v717 = vsub.s32 0, %v716
        %v718 = vrot.slane %v713, %v717
        %v720 = vadd.f32 %v708, %v718
        %v721 = vxor.u32 %v720, 2147483648
        %v722 = vmul.f32 %v721, 1.442695
        %v723 = vpow.pop %v722
        %v724 = vadd.f32 %v723, 1.0
        %v725 = vrcp.pop %v724
        %v726 = vmul.f32 1.0, %v725
        %v727 = vmul.f32 %v720, %v726
        %v728 = vpack.c.bf16 %v727, %v727
        %v729 = vld [vmem:[#allocation7] sm:$0xff]
        %v730 = vld [vmem:[#allocation7 + $0x8] sm:$0xff]
        %v731 = vld [vmem:[#allocation7 + $0x10] sm:$0xff]
        %v732 = vld [vmem:[#allocation7 + $0x18] sm:$0xff]
        %v733 = vld [vmem:[#allocation7 + $0x20] sm:$0xff]
        %v734 = vld [vmem:[#allocation7 + $0x28] sm:$0xff]
        %v735 = vld [vmem:[#allocation7 + $0x30] sm:$0xff]
        %v736 = vld [vmem:[#allocation7 + $0x38] sm:$0xff]
        %v737 = vld [vmem:[#allocation7 + $0x40] sm:$0xff]
        %v738 = vld [vmem:[#allocation7 + $0x48] sm:$0xff]
        %v739 = vld [vmem:[#allocation7 + $0x50] sm:$0xff]
        %v740 = vld [vmem:[#allocation7 + $0x58] sm:$0xff]
        %v741 = vld [vmem:[#allocation7 + $0x60] sm:$0xff]
        %v742 = vld [vmem:[#allocation7 + $0x68] sm:$0xff]
        %v743 = vld [vmem:[#allocation7 + $0x70] sm:$0xff]
        %v744 = vld [vmem:[#allocation7 + $0x78] sm:$0xff]
        %v745 = vld [vmem:[%s6] sm:$0x3]
        %v747 = vlaneseq
        %v748 = vshrl.u32 %v747, 7
        %v749 = vsub.s32 0, %v748
        %v750 = vrot.slane %v745, %v749
        %v751 = vlaneseq
        %v752 = vshrl.u32 %v751, 7
        %v753 = vsub.s32 1, %v752
        %v754 = vrot.slane %v745, %v753
        %v773 = vunpack.c.l.b16 %v729
        %v774 = vunpack.c.h.b16 %v729
        %v775 = vunpack.c.l.b16 %v730
        %v776 = vunpack.c.h.b16 %v730
        %v777 = vunpack.c.l.b16 %v731
        %v778 = vunpack.c.h.b16 %v731
        %v779 = vunpack.c.l.b16 %v732
        %v780 = vunpack.c.h.b16 %v732
        %v781 = vunpack.c.l.b16 %v733
        %v782 = vunpack.c.h.b16 %v733
        %v783 = vunpack.c.l.b16 %v734
        %v784 = vunpack.c.h.b16 %v734
        %v785 = vunpack.c.l.b16 %v735
        %v786 = vunpack.c.h.b16 %v735
        %v787 = vunpack.c.l.b16 %v736
        %v788 = vunpack.c.h.b16 %v736
        %v789 = vunpack.c.l.b16 %v737
        %v790 = vunpack.c.h.b16 %v737
        %v791 = vunpack.c.l.b16 %v738
        %v792 = vunpack.c.h.b16 %v738
        %v793 = vunpack.c.l.b16 %v739
        %v794 = vunpack.c.h.b16 %v739
        %v795 = vunpack.c.l.b16 %v740
        %v796 = vunpack.c.h.b16 %v740
        %v797 = vunpack.c.l.b16 %v741
        %v798 = vunpack.c.h.b16 %v741
        %v799 = vunpack.c.l.b16 %v742
        %v800 = vunpack.c.h.b16 %v742
        %v801 = vunpack.c.l.b16 %v743
        %v802 = vunpack.c.h.b16 %v743
        %v803 = vunpack.c.l.b16 %v744
        %v804 = vunpack.c.h.b16 %v744
        %v805 = vpack.c.b16 %v775, %v773
        %v806 = vpack.c.b16 %v776, %v774
        %v807 = vpack.c.b16 %v779, %v777
        %v808 = vpack.c.b16 %v780, %v778
        %v809 = vpack.c.b16 %v783, %v781
        %v810 = vpack.c.b16 %v784, %v782
        %v811 = vpack.c.b16 %v787, %v785
        %v812 = vpack.c.b16 %v788, %v786
        %v813 = vpack.c.b16 %v791, %v789
        %v814 = vpack.c.b16 %v792, %v790
        %v815 = vpack.c.b16 %v795, %v793
        %v816 = vpack.c.b16 %v796, %v794
        %v817 = vpack.c.b16 %v799, %v797
        %v818 = vpack.c.b16 %v800, %v798
        %v819 = vpack.c.b16 %v803, %v801
        %v820 = vpack.c.b16 %v804, %v802
        %837 = vmatprep.subr.bf16.mxu0 %v820
        %838 = vmatpush1.bf16.msra.mxu0 %v819
        %839 = vmatprep.subr.bf16.mxu0 %v818
        %840 = vmatpush1.bf16.msra.mxu0 %v817
        %841 = vmatprep.subr.bf16.mxu0 %v816
        %842 = vmatpush1.bf16.msra.mxu0 %v815
        %843 = vmatprep.subr.bf16.mxu0 %v814
        %844 = vmatpush1.bf16.msra.mxu0 %v813
        %845 = vmatprep.subr.bf16.mxu0 %v812
        %846 = vmatpush1.bf16.msra.mxu0 %v811
        %847 = vmatprep.subr.bf16.mxu0 %v810
        %848 = vmatpush1.bf16.msra.mxu0 %v809
        %849 = vmatprep.subr.bf16.mxu0 %v808
        %850 = vmatpush1.bf16.msra.mxu0 %v807
        %851 = vmatprep.subr.bf16.mxu0 %v806
        %852 = vmatpush1.bf16.msra.mxu0 %v805
        %853 = vmatprep.subr.bf16.mxu0 0
        %854 = vmatpush2.bf16.msra.mxu0 0
        %855 = vmatprep.subr.bf16.mxu0 0
        %856 = vmatpush2.bf16.msra.mxu0 0
        %857 = vmatprep.subr.bf16.mxu0 0
        %858 = vmatpush2.bf16.msra.mxu0 0
        %859 = vmatprep.subr.bf16.mxu0 0
        %860 = vmatpush2.bf16.msra.mxu0 0
        %861 = vmatprep.subr.bf16.mxu0 0
        %862 = vmatpush2.bf16.msra.mxu0 0
        %863 = vmatprep.subr.bf16.mxu0 0
        %864 = vmatpush2.bf16.msra.mxu0 0
        %865 = vmatprep.subr.bf16.mxu0 0
        %866 = vmatpush2.bf16.msra.mxu0 0
        %867 = vmatprep.subr.bf16.mxu0 0
        %868 = vmatpush2.bf16.msra.mxu0 0
        %869 = vmatprep.mubr.bf16.mxu0 0
        %870 = vmatmul.mubr.bf16.gmra.mxu0 %v728
        %v871 = vpop.f32.mrf.mxu0
        %v872 = vadd.f32 %v750, %v871
        %v873 = vpop.f32.mrf.mxu0
        %v874 = vadd.f32 %v754, %v873
        %v875 = vpop.f32.mrf.mxu0
        %v876 = vpop.f32.mrf.mxu0
        %877 = vdwg.mxu0
        %878 = vst [vmem:[%s336] sm:$0xff] %v872
        %879 = vst [vmem:[%s336 + $0x8] sm:$0xff] %v874
        %s880 = sand.u32 %s190, 1
        %s881 = scalar_lea.sflag [#allocation4], %s880
        %s882 = sand.u32 %s190, 1
        %s883 = smul.addr %s882, 16
        %s884 = scalar_lea.vmem [#allocation8], %s883
        // Predicated region
        $region61: #{tpu_custom_call.1} parent=47 // pred_check
          %p885 = pneg %p200
        $region62: #{tpu_custom_call.1} parent=47 // pred_check_branch
          %887 = sbr.rel (%p885) target = $region64
        $region63: #{tpu_custom_call.1} parent=47 // pred_region
          %s889 = ssub.s32 256, 256
          %890 = vsyncadd %s881, %s889
          %s891 = smul.addr %s25, 2
          %s892 = smul.addr %s891, 128
          %s893 = scalar_lea.hbm %s7, %s892
          %s895 = sshll.u32 %s884, 4
          %s896 = int_to_ptr.vmem [resolvable:$true] %s895
          %898 = dma.vmem_to_hbm [thread:$0]  %s896, 256, %s893, %s881
        $region64: #{tpu_custom_call.1} parent=47 // pred_fallthru
          _
      $region48: #{tpu_custom_call.1} parent=5 // pred_fallthru
        _
      %p899 = scmp.le.s32.totalorder 2, %s20
      // Predicated region
      $region65: #{tpu_custom_call.1} parent=5 // pred_check
        %p900 = pneg %p899
      $region66: #{tpu_custom_call.1} parent=5 // pred_check_branch
        %902 = sbr.rel (%p900) target = $region68
      $region67: #{tpu_custom_call.1} parent=5 // pred_region
        %s903 = ssub.s32 %s20, 2
        // Predicated region
        $region69: #{tpu_custom_call.1} parent=67 // pred_check
          %p904 = pneg %p206
        $region70: #{tpu_custom_call.1} parent=67 // pred_check_branch
          %906 = sbr.rel (%p904) target = $region72
        $region71: #{tpu_custom_call.1} parent=67 // pred_region
          %s907 = sand.u32 %s191, 1
          %s908 = scalar_lea.sflag [#allocation4], %s907
          %s909 = sand.u32 %s191, 1
          %s910 = smul.addr %s909, 16
          %s911 = scalar_lea.vmem [#allocation8], %s910
          %912 = dma.done %s908, 256
        $region72: #{tpu_custom_call.1} parent=67 // pred_fallthru
          _
      $region68: #{tpu_custom_call.1} parent=5 // pred_fallthru
        _
    $region6: #{tpu_custom_call.1} parent=1 // loop_footer
      %s24 = sadd.s32 1, %s20
    $region7: #{tpu_custom_call.1} parent=1 // loop_footer_branch
      %19 = sbr.rel target = $region3
    $region8: #{tpu_custom_call.1} parent=1 // loop_exit
      _
    %913 = vsyncpa [#allocation3], 1
    %s914 = scalar_lea.sflag [#allocation3], 1
    %915 = vsyncpa %s914, 1
    %916 = vsyncpa [#allocation6], 1
    %917 = vsyncpa [#allocation4], 1
    %s918 = scalar_lea.sflag [#allocation4], 1
    %919 = vsyncpa %s918, 1

</llo_original>
